<compile_context>
chip_gen: v7x
topology: tpu7x:2x2x1
jax: 0.10.0
libtpu: 0.0.40
codegen_flags: <defaults>
</compile_context>

<pallas_src>
import jax
import jax.numpy as jnp
from jax.experimental import pallas as pl
from jax.experimental.pallas import tpu as pltpu

NEG_BIG = -1e30  # bias fill for padded vocab columns (exp -> 0, no inf-inf NaNs)


def _round_up(x, m):
    return (x + m - 1) // m * m


def actor_logprob_kernel(emb_ref, w1_ref, b1_ref, wlm_ref, blm_ref, lab_ref,
                         out_ref, h_sc, m_sc, l_sc, ll_sc):
    # emb_ref: (tile_n, H) bf16     w1_ref: (H, H) bf16     b1_ref: (1, H) f32
    # wlm_ref: (H, tile_v) bf16     blm_ref: (1, tile_v) f32
    # lab_ref: (tile_n, 1) int32    out_ref: (tile_n, 1) f32
    # scratch: h_sc (tile_n, H) bf16; m_sc/l_sc/ll_sc (tile_n, 1) f32
    v = pl.program_id(1)
    tile_v = wlm_ref.shape[1]

    @pl.when(v == 0)
    def _init():
        # First vocab step of this row tile: compute hidden activations once and
        # reset the online-logsumexp / label-gather accumulators.
        h = jnp.tanh(
            jnp.dot(emb_ref[...], w1_ref[...], preferred_element_type=jnp.float32)
            + b1_ref[...]
        )                                                    # f32 activations
        h_sc[...] = h.astype(jnp.bfloat16)                   # bf16 MXU operand for lm_head
        m_sc[...] = jnp.full(m_sc.shape, -jnp.inf, jnp.float32)
        l_sc[...] = jnp.zeros(l_sc.shape, jnp.float32)
        ll_sc[...] = jnp.zeros(ll_sc.shape, jnp.float32)

    # Logits for this vocab slice: bf16 x bf16 on the MXU, f32 accumulation.
    logits = (
        jnp.dot(h_sc[...], wlm_ref[...], preferred_element_type=jnp.float32)
        + blm_ref[...]
    )                                                        # (tile_n, tile_v) f32

    # Fused label gather for this slice (single reduction pass, offset iota per tile).
    lane = jax.lax.broadcasted_iota(jnp.int32, logits.shape, 1) + v * tile_v
    ll_sc[...] += jnp.sum(
        jnp.where(lane == lab_ref[...], logits, 0.0), axis=-1, keepdims=True
    )

    # Online logsumexp across vocab tiles (running max / running scaled sum).
    m_prev = m_sc[...]
    m_new = jnp.maximum(m_prev, jnp.max(logits, axis=-1, keepdims=True))
    l_sc[...] = l_sc[...] * jnp.exp(m_prev - m_new) + jnp.sum(
        jnp.exp(logits - m_new), axis=-1, keepdims=True
    )
    m_sc[...] = m_new

    @pl.when(v == pl.num_programs(1) - 1)
    def _finalize():
        out_ref[...] = ll_sc[...] - (m_sc[...] + jnp.log(l_sc[...]))


def fused_lm_logprobs(emb, w1, b1, wlm, blm, labels, *, tile_n=256, tile_v=512):
    """emb: (N, H) f32, labels: (N,) int -> (N,) f32 log P(label | token context)."""
    N, H = emb.shape
    V = wlm.shape[1]

    # Vocab tiling: tile_v a multiple of 128 lanes; pad V so tile_v divides it.
    tile_v = min(tile_v, _round_up(V, 128))
    V_pad = _round_up(V, tile_v)
    # Row tiling: big tiles to fill the MXU; pad rows (sliced off afterwards).
    N_pad = _round_up(N, tile_n)

    emb_p = jnp.pad(emb, ((0, N_pad - N), (0, 0))).astype(jnp.bfloat16)
    lab_p = jnp.pad(labels.astype(jnp.int32), (0, N_pad - N)).reshape(N_pad, 1)
    w1_b = w1.astype(jnp.bfloat16)
    wlm_b = jnp.pad(wlm, ((0, 0), (0, V_pad - V))).astype(jnp.bfloat16)
    b1_2d = b1.astype(jnp.float32).reshape(1, H)
    blm_2d = jnp.pad(
        blm.astype(jnp.float32), (0, V_pad - V), constant_values=NEG_BIG
    ).reshape(1, V_pad)

    n_row = N_pad // tile_n
    n_vtl = V_pad // tile_v

    cost = pl.CostEstimate(
        flops=int(2 * N_pad * H * H + 2 * N_pad * H * V_pad),
        transcendentals=int(N_pad * H + N_pad * V_pad),
        bytes_accessed=int(
            emb_p.size * 2 + lab_p.size * 4 + N_pad * 4
            + n_row * (w1_b.size * 2 + wlm_b.size * 2 + (H + V_pad) * 4)
        ),
    )

    out = pl.pallas_call(
        actor_logprob_kernel,
        out_shape=jax.ShapeDtypeStruct((N_pad, 1), jnp.float32),
        grid_spec=pltpu.PrefetchScalarGridSpec(
            num_scalar_prefetch=0,
            grid=(n_row, n_vtl),                                 # vocab (reduction) axis innermost
            in_specs=[
                pl.BlockSpec((tile_n, H), lambda i, v: (i, 0)),  # token rows (resident across v)
                pl.BlockSpec((H, H), lambda i, v: (0, 0)),       # W1 (resident)
                pl.BlockSpec((1, H), lambda i, v: (0, 0)),       # b1
                pl.BlockSpec((H, tile_v), lambda i, v: (0, v)),  # W_lm streamed over vocab tiles
                pl.BlockSpec((1, tile_v), lambda i, v: (0, v)),  # b_lm
                pl.BlockSpec((tile_n, 1), lambda i, v: (i, 0)),  # labels
            ],
            out_specs=pl.BlockSpec((tile_n, 1), lambda i, v: (i, 0)),
            scratch_shapes=[
                pltpu.VMEM((tile_n, H), jnp.bfloat16),  # cached hidden activations
                pltpu.VMEM((tile_n, 1), jnp.float32),   # running max
                pltpu.VMEM((tile_n, 1), jnp.float32),   # running sum(exp)
                pltpu.VMEM((tile_n, 1), jnp.float32),   # gathered label logit
            ],
        ),
        compiler_params=pltpu.CompilerParams(
            dimension_semantics=("parallel", "arbitrary"),
        ),
        cost_estimate=cost,
    )(emb_p, w1_b, b1_2d, wlm_b, blm_2d, lab_p)
    return out[:N, 0]


def actor_forward(params, sequences, attention_mask, num_actions):
    """Reproduces Actor.forward (packing_samples=False, return_output=False)."""
    B, T = sequences.shape
    H = params["tok_emb"].shape[1]

    # position_ids = attention_mask.long().cumsum(-1) - 1 ; masked_fill(mask==0, 1)
    mask = attention_mask.astype(jnp.int32)
    position_ids = jnp.cumsum(mask, axis=-1) - 1
    position_ids = jnp.where(mask == 0, 1, position_ids)

    # Embedding lookup (glue): token + positional embeddings
    h0 = params["tok_emb"][sequences] + params["pos_emb"][position_ids]   # (B, T, H)
    h0 = h0.reshape(B * T, H)

    # Position t predicts sequences[:, t+1]; last position gets a dummy label
    # (sliced off afterwards, matching logits[:, :-1, :] vs sequences[:, 1:]).
    labels_full = jnp.concatenate(
        [sequences[:, 1:], jnp.zeros((B, 1), dtype=sequences.dtype)], axis=1
    ).reshape(B * T)

    logp_full = fused_lm_logprobs(
        h0, params["w1"], params["b1"], params["wlm"], params["blm"], labels_full
    ).reshape(B, T)

    log_probs = logp_full[:, :-1]            # == log_probs_from_logits(logits[:, :-1], seq[:, 1:])
    action_log_probs = log_probs[:, -num_actions:]
    return action_log_probs


def actor_forward_reference(params, sequences, attention_mask, num_actions):
    """Pure-JAX reference of the same synthetic model + Actor.forward semantics.

    Weights/activations are rounded to bf16 exactly like the kernel's MXU inputs so the
    comparison is apples-to-apples (f32 accumulation in both paths)."""
    mask = attention_mask.astype(jnp.int32)
    position_ids = jnp.cumsum(mask, axis=-1) - 1
    position_ids = jnp.where(mask == 0, 1, position_ids)
    h0 = params["tok_emb"][sequences] + params["pos_emb"][position_ids]
    x = h0.astype(jnp.bfloat16).astype(jnp.float32)
    w1 = params["w1"].astype(jnp.bfloat16).astype(jnp.float32)
    wlm = params["wlm"].astype(jnp.bfloat16).astype(jnp.float32)
    h = jnp.tanh(x @ w1 + params["b1"])
    hb = h.astype(jnp.bfloat16).astype(jnp.float32)
    logits = hb @ wlm + params["blm"]                                # (B, T, V)
    lsm = jax.nn.log_softmax(logits[:, :-1, :], axis=-1)
    lp = jnp.take_along_axis(lsm, sequences[:, 1:, None], axis=-1)[..., 0]
    return lp[:, -num_actions:]


if __name__ == "__main__":
    # Small shapes: batch=2, seq=8, hidden=32, vocab=128, num_actions=4
    B, T, H, V = 2, 8, 32, 128
    num_actions = 4

    key = jax.random.PRNGKey(0)
    k_tok, k_pos, k_w1, k_wlm, k_seq, k_len = jax.random.split(key, 6)

    params = {
        "tok_emb": 0.1 * jax.random.normal(k_tok, (V, H), jnp.float32),
        "pos_emb": 0.1 * jax.random.normal(k_pos, (T, H), jnp.float32),
        "w1": 0.1 * jax.random.normal(k_w1, (H, H), jnp.float32),
        "b1": jnp.zeros((H,), jnp.float32),
        "wlm": 0.1 * jax.random.normal(k_wlm, (H, V), jnp.float32),
        "blm": jnp.zeros((V,), jnp.float32),
    }

    sequences = jax.random.randint(k_seq, (B, T), 0, V, dtype=jnp.int32)
    # Left-padded attention mask (first few tokens masked out for one sample)
    lens = jnp.array([T, T - 3], dtype=jnp.int32)
    col = jnp.arange(T)[None, :]
    attention_mask = (col >= (T - lens)[:, None]).astype(jnp.int32)

    out = actor_forward(params, sequences, attention_mask, num_actions)
    out = jax.block_until_ready(out)

    ref = actor_forward_reference(params, sequences, attention_mask, num_actions)
    assert out.shape == (B, num_actions)
    assert jnp.allclose(out, ref, atol=2e-3, rtol=2e-3), (out, ref)

    # TODO(synk): ring-attention / packing_samples branches need torch.distributed-style
    # process groups; only the standard (non-packed) forward path is implemented here.
    print("KERNEL_OK")
</pallas_src>

<mosaic_0001>
module attributes {stable_mosaic.version = 11 : i64} {
  func.func @actor_logprob_kernel(%arg0: i32, %arg1: i32, %arg2: memref<256x32xbf16, #tpu.memory_space<vmem>>, %arg3: memref<32x32xbf16, #tpu.memory_space<vmem>>, %arg4: memref<1x32xf32, #tpu.memory_space<vmem>>, %arg5: memref<32x128xbf16, #tpu.memory_space<vmem>>, %arg6: memref<1x128xf32, #tpu.memory_space<vmem>>, %arg7: memref<256x1xi32, #tpu.memory_space<vmem>>, %arg8: memref<256x1xf32, #tpu.memory_space<vmem>>, %arg9: memref<256x32xbf16, #tpu.memory_space<vmem>>, %arg10: memref<256x1xf32, #tpu.memory_space<vmem>>, %arg11: memref<256x1xf32, #tpu.memory_space<vmem>>, %arg12: memref<256x1xf32, #tpu.memory_space<vmem>>) attributes {dimension_semantics = [#tpu.dimension_semantics<parallel>, #tpu.dimension_semantics<arbitrary>], iteration_bounds = array<i64: 1, 1>, scalar_prefetch = 0 : i64, scratch_operands = 4 : i64, tpu.core_type = #tpu.core_type<tc>, window_params = [{transform_indices = @transform_0, window_bounds = array<i64: 256, 32>}, {pipeline_mode = #tpu.pipeline_mode<synchronous>, transform_indices = @transform_1, window_bounds = array<i64: 32, 32>}, {pipeline_mode = #tpu.pipeline_mode<synchronous>, transform_indices = @transform_2, window_bounds = array<i64: 1, 32>}, {transform_indices = @transform_3, window_bounds = array<i64: 32, 128>}, {transform_indices = @transform_4, window_bounds = array<i64: 1, 128>}, {transform_indices = @transform_5, window_bounds = array<i64: 256, 1>}, {transform_indices = @transform_6, window_bounds = array<i64: 256, 1>}]} {
    %c0_i32 = arith.constant 0 : i32
    %0 = arith.cmpi eq, %arg1, %c0_i32 : i32
    %1 = arith.extui %0 : i1 to i32
    %c0_i32_0 = arith.constant 0 : i32
    %2 = arith.cmpi ne, %1, %c0_i32_0 : i32
    scf.if %2 {
      %c0_26 = arith.constant 0 : index
      %c0_27 = arith.constant 0 : index
      %42 = vector.load %arg2[%c0_26, %c0_27] : memref<256x32xbf16, #tpu.memory_space<vmem>>, vector<256x32xbf16>
      %c0_28 = arith.constant 0 : index
      %c0_29 = arith.constant 0 : index
      %43 = vector.load %arg3[%c0_28, %c0_29] : memref<32x32xbf16, #tpu.memory_space<vmem>>, vector<32x32xbf16>
      %cst_30 = arith.constant dense<0.000000e+00> : vector<256x32xf32>
      %44 = tpu.matmul %42, %43, %cst_30 {dimension_numbers = #tpu.dot_dimension_numbers<[1], [0], [0], [1], [0, 0, 1, 1], [], []>} : vector<256x32xbf16>, vector<32x32xbf16>, vector<256x32xf32> -> vector<256x32xf32>
      %c0_31 = arith.constant 0 : index
      %c0_32 = arith.constant 0 : index
      %45 = vector.load %arg4[%c0_31, %c0_32] : memref<1x32xf32, #tpu.memory_space<vmem>>, vector<1x32xf32>
      %46 = vector.broadcast %45 : vector<1x32xf32> to vector<256x32xf32>
      %47 = arith.addf %44, %46 : vector<256x32xf32>
      %48 = math.tanh %47 : vector<256x32xf32>
      %49 = arith.truncf %48 : vector<256x32xf32> to vector<256x32xbf16>
      %c0_33 = arith.constant 0 : index
      %c0_34 = arith.constant 0 : index
      %50 = vector.load %arg9[%c0_33, %c0_34] : memref<256x32xbf16, #tpu.memory_space<vmem>>, vector<256x32xbf16>
      tpu.vector_store %arg9[%c0_33, %c0_34], %49 {strides = array<i32>} : memref<256x32xbf16, #tpu.memory_space<vmem>>, vector<256x32xbf16>,
      %cst_35 = arith.constant 0xFF800000 : f32
      %51 = vector.broadcast %cst_35 : f32 to vector<256x1xf32>
      %c0_36 = arith.constant 0 : index
      %c0_37 = arith.constant 0 : index
      %52 = vector.load %arg10[%c0_36, %c0_37] : memref<256x1xf32, #tpu.memory_space<vmem>>, vector<256x1xf32>
      tpu.vector_store %arg10[%c0_36, %c0_37], %51 {strides = array<i32>} : memref<256x1xf32, #tpu.memory_space<vmem>>, vector<256x1xf32>,
      %cst_38 = arith.constant 0.000000e+00 : f32
      %53 = vector.broadcast %cst_38 : f32 to vector<256x1xf32>
      %c0_39 = arith.constant 0 : index
      %c0_40 = arith.constant 0 : index
      %54 = vector.load %arg11[%c0_39, %c0_40] : memref<256x1xf32, #tpu.memory_space<vmem>>, vector<256x1xf32>
      tpu.vector_store %arg11[%c0_39, %c0_40], %53 {strides = array<i32>} : memref<256x1xf32, #tpu.memory_space<vmem>>, vector<256x1xf32>,
      %cst_41 = arith.constant 0.000000e+00 : f32
      %55 = vector.broadcast %cst_41 : f32 to vector<256x1xf32>
      %c0_42 = arith.constant 0 : index
      %c0_43 = arith.constant 0 : index
      %56 = vector.load %arg12[%c0_42, %c0_43] : memref<256x1xf32, #tpu.memory_space<vmem>>, vector<256x1xf32>
      tpu.vector_store %arg12[%c0_42, %c0_43], %55 {strides = array<i32>} : memref<256x1xf32, #tpu.memory_space<vmem>>, vector<256x1xf32>,
    } else {
    }
    %c0 = arith.constant 0 : index
    %c0_1 = arith.constant 0 : index
    %3 = vector.load %arg9[%c0, %c0_1] : memref<256x32xbf16, #tpu.memory_space<vmem>>, vector<256x32xbf16>
    %c0_2 = arith.constant 0 : index
    %c0_3 = arith.constant 0 : index
    %4 = vector.load %arg5[%c0_2, %c0_3] : memref<32x128xbf16, #tpu.memory_space<vmem>>, vector<32x128xbf16>
    %cst = arith.constant dense<0.000000e+00> : vector<256x128xf32>
    %5 = tpu.matmul %3, %4, %cst {dimension_numbers = #tpu.dot_dimension_numbers<[1], [0], [0], [1], [0, 0, 1, 1], [], []>} : vector<256x32xbf16>, vector<32x128xbf16>, vector<256x128xf32> -> vector<256x128xf32>
    %c0_4 = arith.constant 0 : index
    %c0_5 = arith.constant 0 : index
    %6 = vector.load %arg6[%c0_4, %c0_5] : memref<1x128xf32, #tpu.memory_space<vmem>>, vector<1x128xf32>
    %7 = vector.broadcast %6 : vector<1x128xf32> to vector<256x128xf32>
    %8 = arith.addf %5, %7 : vector<256x128xf32>
    %9 = tpu.iota {dimensions = array<i32: 1>} : vector<256x128xi32>
    %c128_i32 = arith.constant 128 : i32
    %10 = arith.muli %arg1, %c128_i32 : i32
    %11 = vector.broadcast %10 : i32 to vector<256x128xi32>
    %12 = arith.addi %9, %11 : vector<256x128xi32>
    %c0_6 = arith.constant 0 : index
    %c0_7 = arith.constant 0 : index
    %13 = vector.load %arg12[%c0_6, %c0_7] : memref<256x1xf32, #tpu.memory_space<vmem>>, vector<256x1xf32>
    %c0_8 = arith.constant 0 : index
    %c0_9 = arith.constant 0 : index
    %14 = vector.load %arg7[%c0_8, %c0_9] : memref<256x1xi32, #tpu.memory_space<vmem>>, vector<256x1xi32>
    %15 = vector.broadcast %14 : vector<256x1xi32> to vector<256x128xi32>
    %16 = arith.cmpi eq, %12, %15 : vector<256x128xi32>
    %cst_10 = arith.constant 0.000000e+00 : f32
    %17 = vector.broadcast %cst_10 : f32 to vector<256x128xf32>
    %18 = arith.select %16, %8, %17 : vector<256x128xi1>, vector<256x128xf32>
    %cst_11 = arith.constant dense<0.000000e+00> : vector<256xf32>
    %19 = vector.multi_reduction <add>, %18, %cst_11 [1] : vector<256x128xf32> to vector<256xf32>
    %20 = vector.shape_cast %19 : vector<256xf32> to vector<256x1xf32>
    %21 = arith.addf %13, %20 : vector<256x1xf32>
    %c0_12 = arith.constant 0 : index
    %c0_13 = arith.constant 0 : index
    %22 = vector.load %arg12[%c0_12, %c0_13] : memref<256x1xf32, #tpu.memory_space<vmem>>, vector<256x1xf32>
    tpu.vector_store %arg12[%c0_12, %c0_13], %21 {strides = array<i32>} : memref<256x1xf32, #tpu.memory_space<vmem>>, vector<256x1xf32>,
    %c0_14 = arith.constant 0 : index
    %c0_15 = arith.constant 0 : index
    %23 = vector.load %arg10[%c0_14, %c0_15] : memref<256x1xf32, #tpu.memory_space<vmem>>, vector<256x1xf32>
    %cst_16 = arith.constant dense<0xFF800000> : vector<256xf32>
    %24 = vector.multi_reduction <maximumf>, %8, %cst_16 [1] : vector<256x128xf32> to vector<256xf32>
    %25 = vector.shape_cast %24 : vector<256xf32> to vector<256x1xf32>
    %26 = arith.maximumf %23, %25 : vector<256x1xf32>
    %c0_17 = arith.constant 0 : index
    %c0_18 = arith.constant 0 : index
    %27 = vector.load %arg11[%c0_17, %c0_18] : memref<256x1xf32, #tpu.memory_space<vmem>>, vector<256x1xf32>
    %28 = arith.subf %23, %26 : vector<256x1xf32>
    %29 = math.exp %28 : vector<256x1xf32>
    %30 = arith.mulf %27, %29 : vector<256x1xf32>
    %31 = vector.broadcast %26 : vector<256x1xf32> to vector<256x128xf32>
    %32 = arith.subf %8, %31 : vector<256x128xf32>
    %33 = math.exp %32 : vector<256x128xf32>
    %cst_19 = arith.constant dense<0.000000e+00> : vector<256xf32>
    %34 = vector.multi_reduction <add>, %33, %cst_19 [1] : vector<256x128xf32> to vector<256xf32>
    %35 = vector.shape_cast %34 : vector<256xf32> to vector<256x1xf32>
    %36 = arith.addf %30, %35 : vector<256x1xf32>
    %c0_20 = arith.constant 0 : index
    %c0_21 = arith.constant 0 : index
    %37 = vector.load %arg11[%c0_20, %c0_21] : memref<256x1xf32, #tpu.memory_space<vmem>>, vector<256x1xf32>
    tpu.vector_store %arg11[%c0_20, %c0_21], %36 {strides = array<i32>} : memref<256x1xf32, #tpu.memory_space<vmem>>, vector<256x1xf32>,
    %c0_22 = arith.constant 0 : index
    %c0_23 = arith.constant 0 : index
    %38 = vector.load %arg10[%c0_22, %c0_23] : memref<256x1xf32, #tpu.memory_space<vmem>>, vector<256x1xf32>
    tpu.vector_store %arg10[%c0_22, %c0_23], %26 {strides = array<i32>} : memref<256x1xf32, #tpu.memory_space<vmem>>, vector<256x1xf32>,
    %c0_i32_24 = arith.constant 0 : i32
    %39 = arith.cmpi eq, %arg1, %c0_i32_24 : i32
    %40 = arith.extui %39 : i1 to i32
    %c0_i32_25 = arith.constant 0 : i32
    %41 = arith.cmpi ne, %40, %c0_i32_25 : i32
    scf.if %41 {
      %c0_26 = arith.constant 0 : index
      %c0_27 = arith.constant 0 : index
      %42 = vector.load %arg12[%c0_26, %c0_27] : memref<256x1xf32, #tpu.memory_space<vmem>>, vector<256x1xf32>
      %c0_28 = arith.constant 0 : index
      %c0_29 = arith.constant 0 : index
      %43 = vector.load %arg10[%c0_28, %c0_29] : memref<256x1xf32, #tpu.memory_space<vmem>>, vector<256x1xf32>
      %c0_30 = arith.constant 0 : index
      %c0_31 = arith.constant 0 : index
      %44 = vector.load %arg11[%c0_30, %c0_31] : memref<256x1xf32, #tpu.memory_space<vmem>>, vector<256x1xf32>
      %45 = math.log %44 : vector<256x1xf32>
      %46 = arith.addf %43, %45 : vector<256x1xf32>
      %47 = arith.subf %42, %46 : vector<256x1xf32>
      %c0_32 = arith.constant 0 : index
      %c0_33 = arith.constant 0 : index
      %48 = vector.load %arg8[%c0_32, %c0_33] : memref<256x1xf32, #tpu.memory_space<vmem>>, vector<256x1xf32>
      tpu.vector_store %arg8[%c0_32, %c0_33], %47 {strides = array<i32>} : memref<256x1xf32, #tpu.memory_space<vmem>>, vector<256x1xf32>,
    } else {
    }
    return
  }
  func.func @transform_0(%arg0: i32, %arg1: i32) -> (i32, i32) {
    %c0_i32 = arith.constant 0 : i32
    %c0_i32_0 = arith.constant 0 : i32
    return %arg0, %c0_i32 : i32, i32
  }
  func.func @transform_1(%arg0: i32, %arg1: i32) -> (i32, i32) {
    %c0_i32 = arith.constant 0 : i32
    %c0_i32_0 = arith.constant 0 : i32
    %c0_i32_1 = arith.constant 0 : i32
    return %c0_i32, %c0_i32_0 : i32, i32
  }
  func.func @transform_2(%arg0: i32, %arg1: i32) -> (i32, i32) {
    %c0_i32 = arith.constant 0 : i32
    %c0_i32_0 = arith.constant 0 : i32
    %c0_i32_1 = arith.constant 0 : i32
    return %c0_i32, %c0_i32_0 : i32, i32
  }
  func.func @transform_3(%arg0: i32, %arg1: i32) -> (i32, i32) {
    %c0_i32 = arith.constant 0 : i32
    %c0_i32_0 = arith.constant 0 : i32
    return %c0_i32, %arg1 : i32, i32
  }
  func.func @transform_4(%arg0: i32, %arg1: i32) -> (i32, i32) {
    %c0_i32 = arith.constant 0 : i32
    %c0_i32_0 = arith.constant 0 : i32
    return %c0_i32, %arg1 : i32, i32
  }
  func.func @transform_5(%arg0: i32, %arg1: i32) -> (i32, i32) {
    %c0_i32 = arith.constant 0 : i32
    %c0_i32_0 = arith.constant 0 : i32
    return %arg0, %c0_i32 : i32, i32
  }
  func.func @transform_6(%arg0: i32, %arg1: i32) -> (i32, i32) {
    %c0_i32 = arith.constant 0 : i32
    %c0_i32_0 = arith.constant 0 : i32
    return %arg0, %c0_i32 : i32, i32
  }
}

</mosaic_0001>

<llo_original>
// kernel: tpu_custom_call.1
$region0: #{tpu_custom_call.1}
  #allocation0 [shape = 'u32[]', space=smem, size = 0x4, offset = 0x4, fixed_abs, tag = 'smem constant byte address 0x4 - core index']
  #allocation1 [shape = 'u32[144,128]{1,0:T(1,128)}', space=vmem, size = 0x12000, scoped, tag = 'internal scratch']
  #allocation2 [shape = 'bf16[256,32]{1,0:T(16,128)(2,1)}', space=vmem, size = 0x10000, scoped, tag = 'scratch operand']
  #allocation3 [shape = 'f32[256,1]{1,0:T(8,128)}', space=vmem, size = 0x20000, scoped, tag = 'scratch operand']
  #allocation4 [shape = 'f32[256,1]{1,0:T(8,128)}', space=vmem, size = 0x20000, scoped, tag = 'scratch operand']
  #allocation5 [shape = 'f32[256,1]{1,0:T(8,128)}', space=vmem, size = 0x20000, scoped, tag = 'scratch operand']
  %s0 = inlined_call_operand.vmem [shape: bf16[256,32], index: 0, kind: input, shape index: {}]
  %s1 = inlined_call_operand.vmem [shape: bf16[32,32], index: 1, kind: input, shape index: {}]
  %s2 = inlined_call_operand.vmem [shape: f32[1,32], index: 2, kind: input, shape index: {}]
  %s3 = inlined_call_operand.vmem [shape: bf16[32,128], index: 3, kind: input, shape index: {}]
  %s4 = inlined_call_operand.vmem [shape: f32[1,128], index: 4, kind: input, shape index: {}]
  %s5 = inlined_call_operand.vmem [shape: s32[256,1], index: 5, kind: input, shape index: {}]
  %s6 = inlined_call_operand.vmem [shape: f32[256,1], index: 6, kind: output, shape index: {}]
  %s7 = sld [smem:[#allocation0]]
  $region42: #{tpu_custom_call.1} parent=0
    _
  %s9 = ssub.s32 1, %s7
  %s10 = scalar_select 0, %s9, %s7
  // Predicated region
  $region2: #{tpu_custom_call.1} parent=0 // pred_check
    _
  $region3: #{tpu_custom_call.1} parent=0 // pred_check_branch
    %12 = sbr.rel (0) target = $region5
  $region4: #{tpu_custom_call.1} parent=0 // pred_region
    _
  $region5: #{tpu_custom_call.1} parent=0 // pred_fallthru
    _
  // Predicated region
  $region6: #{tpu_custom_call.1} parent=0 // pred_check
    _
  $region7: #{tpu_custom_call.1} parent=0 // pred_check_branch
    %14 = sbr.rel (0) target = $region9
  $region8: #{tpu_custom_call.1} parent=0 // pred_region
    _
  $region9: #{tpu_custom_call.1} parent=0 // pred_fallthru
    _
  // Predicated region
  $region10: #{tpu_custom_call.1} parent=0 // pred_check
    _
  $region11: #{tpu_custom_call.1} parent=0 // pred_check_branch
    %16 = sbr.rel (0) target = $region13
  $region12: #{tpu_custom_call.1} parent=0 // pred_region
    _
  $region13: #{tpu_custom_call.1} parent=0 // pred_fallthru
    _
  // Predicated region
  $region14: #{tpu_custom_call.1} parent=0 // pred_check
    _
  $region15: #{tpu_custom_call.1} parent=0 // pred_check_branch
    %18 = sbr.rel (0) target = $region17
  $region16: #{tpu_custom_call.1} parent=0 // pred_region
    _
  $region17: #{tpu_custom_call.1} parent=0 // pred_fallthru
    _
  // Predicated region
  $region18: #{tpu_custom_call.1} parent=0 // pred_check
    _
  $region19: #{tpu_custom_call.1} parent=0 // pred_check_branch
    %20 = sbr.rel (0) target = $region21
  $region20: #{tpu_custom_call.1} parent=0 // pred_region
    _
  $region21: #{tpu_custom_call.1} parent=0 // pred_fallthru
    _
  // Predicated region
  $region22: #{tpu_custom_call.1} parent=0 // pred_check
    _
  $region23: #{tpu_custom_call.1} parent=0 // pred_check_branch
    %22 = sbr.rel (0) target = $region25
  $region24: #{tpu_custom_call.1} parent=0 // pred_region
    _
  $region25: #{tpu_custom_call.1} parent=0 // pred_fallthru
    _
  %p24 = scmp.eq.s32.totalorder 0, 0
  // Predicated region
  $region26: #{tpu_custom_call.1} parent=0 // pred_check
    %p25 = pneg %p24
  $region27: #{tpu_custom_call.1} parent=0 // pred_check_branch
    %27 = sbr.rel (%p25) target = $region29
  $region28: #{tpu_custom_call.1} parent=0 // pred_region
    %v28 = vld [vmem:[%s0] sm:$0xf]
    %v29 = vld [vmem:[%s0 + $0x4] sm:$0xf]
    %v30 = vld [vmem:[%s0 + $0x8] sm:$0xf]
    %v31 = vld [vmem:[%s0 + $0xc] sm:$0xf]
    %v32 = vld [vmem:[%s0 + $0x10] sm:$0xf]
    %v33 = vld [vmem:[%s0 + $0x14] sm:$0xf]
    %v34 = vld [vmem:[%s0 + $0x18] sm:$0xf]
    %v35 = vld [vmem:[%s0 + $0x1c] sm:$0xf]
    %v36 = vld [vmem:[%s0 + $0x20] sm:$0xf]
    %v37 = vld [vmem:[%s0 + $0x24] sm:$0xf]
    %v38 = vld [vmem:[%s0 + $0x28] sm:$0xf]
    %v39 = vld [vmem:[%s0 + $0x2c] sm:$0xf]
    %v40 = vld [vmem:[%s0 + $0x30] sm:$0xf]
    %v41 = vld [vmem:[%s0 + $0x34] sm:$0xf]
    %v42 = vld [vmem:[%s0 + $0x38] sm:$0xf]
    %v43 = vld [vmem:[%s0 + $0x3c] sm:$0xf]
    %v44 = vld [vmem:[%s0 + $0x40] sm:$0xf]
    %v45 = vld [vmem:[%s0 + $0x44] sm:$0xf]
    %v46 = vld [vmem:[%s0 + $0x48] sm:$0xf]
    %v47 = vld [vmem:[%s0 + $0x4c] sm:$0xf]
    %v48 = vld [vmem:[%s0 + $0x50] sm:$0xf]
    %v49 = vld [vmem:[%s0 + $0x54] sm:$0xf]
    %v50 = vld [vmem:[%s0 + $0x58] sm:$0xf]
    %v51 = vld [vmem:[%s0 + $0x5c] sm:$0xf]
    %v52 = vld [vmem:[%s0 + $0x60] sm:$0xf]
    %v53 = vld [vmem:[%s0 + $0x64] sm:$0xf]
    %v54 = vld [vmem:[%s0 + $0x68] sm:$0xf]
    %v55 = vld [vmem:[%s0 + $0x6c] sm:$0xf]
    %v56 = vld [vmem:[%s0 + $0x70] sm:$0xf]
    %v57 = vld [vmem:[%s0 + $0x74] sm:$0xf]
    %v58 = vld [vmem:[%s0 + $0x78] sm:$0xf]
    %v59 = vld [vmem:[%s0 + $0x7c] sm:$0xf]
    %v60 = vld [vmem:[%s1] sm:$0xf]
    %v61 = vld [vmem:[%s1 + $0x4] sm:$0xf]
    %v62 = vld [vmem:[%s1 + $0x8] sm:$0xf]
    %v63 = vld [vmem:[%s1 + $0xc] sm:$0xf]
    %v64 = vld [vmem:[%s2] sm:$0x1]
    %v66 = vlaneseq
    %v67 = vshrl.u32 %v66, 7
    %v68 = vsub.s32 0, %v67
    %v69 = vrot.slane %v64, %v68
    %v103 = vunpack.c.l.b16 %v28
    %v104 = vunpack.c.l.b16 %v29
    %v105 = vunpack.c.l.b16 %v30
    %v106 = vunpack.c.l.b16 %v31
    %v107 = vunpack.c.l.b16 %v32
    %v108 = vunpack.c.l.b16 %v33
    %v109 = vunpack.c.l.b16 %v34
    %v110 = vunpack.c.l.b16 %v35
    %v111 = vunpack.c.l.b16 %v36
    %v112 = vunpack.c.l.b16 %v37
    %v113 = vunpack.c.l.b16 %v38
    %v114 = vunpack.c.l.b16 %v39
    %v115 = vunpack.c.l.b16 %v40
    %v116 = vunpack.c.l.b16 %v41
    %v117 = vunpack.c.l.b16 %v42
    %v118 = vunpack.c.l.b16 %v43
    %v119 = vunpack.c.l.b16 %v44
    %v120 = vunpack.c.l.b16 %v45
    %v121 = vunpack.c.l.b16 %v46
    %v122 = vunpack.c.l.b16 %v47
    %v123 = vunpack.c.l.b16 %v48
    %v124 = vunpack.c.l.b16 %v49
    %v125 = vunpack.c.l.b16 %v50
    %v126 = vunpack.c.l.b16 %v51
    %v127 = vunpack.c.l.b16 %v52
    %v128 = vunpack.c.l.b16 %v53
    %v129 = vunpack.c.l.b16 %v54
    %v130 = vunpack.c.l.b16 %v55
    %v131 = vunpack.c.l.b16 %v56
    %v132 = vunpack.c.l.b16 %v57
    %v133 = vunpack.c.l.b16 %v58
    %v134 = vunpack.c.l.b16 %v59
    %v135 = vpack.c.b16 %v104, %v103
    %v136 = vpack.c.b16 %v106, %v105
    %v137 = vpack.c.b16 %v108, %v107
    %v138 = vpack.c.b16 %v110, %v109
    %v139 = vpack.c.b16 %v112, %v111
    %v140 = vpack.c.b16 %v114, %v113
    %v141 = vpack.c.b16 %v116, %v115
    %v142 = vpack.c.b16 %v118, %v117
    %v143 = vpack.c.b16 %v120, %v119
    %v144 = vpack.c.b16 %v122, %v121
    %v145 = vpack.c.b16 %v124, %v123
    %v146 = vpack.c.b16 %v126, %v125
    %v147 = vpack.c.b16 %v128, %v127
    %v148 = vpack.c.b16 %v130, %v129
    %v149 = vpack.c.b16 %v132, %v131
    %v150 = vpack.c.b16 %v134, %v133
    %v155 = vunpack.c.l.b16 %v60
    %v156 = vunpack.c.l.b16 %v61
    %v157 = vunpack.c.l.b16 %v62
    %v158 = vunpack.c.l.b16 %v63
    %v159 = vpack.c.b16 %v156, %v155
    %v160 = vpack.c.b16 %v158, %v157
    %vm163 = vcmask 261120
    %v165 = vsel %vm163, %v135, 0
    %v168 = vsel %vm163, %v136, 0
    %v171 = vsel %vm163, %v137, 0
    %v174 = vsel %vm163, %v138, 0
    %v177 = vsel %vm163, %v139, 0
    %v180 = vsel %vm163, %v140, 0
    %v183 = vsel %vm163, %v141, 0
    %v186 = vsel %vm163, %v142, 0
    %v189 = vsel %vm163, %v143, 0
    %v192 = vsel %vm163, %v144, 0
    %v195 = vsel %vm163, %v145, 0
    %v198 = vsel %vm163, %v146, 0
    %v201 = vsel %vm163, %v147, 0
    %v204 = vsel %vm163, %v148, 0
    %v207 = vsel %vm163, %v149, 0
    %v210 = vsel %vm163, %v150, 0
    %212 = vmatprep.subr.bf16.mxu0 0
    %213 = vmatpush1.bf16.msra.mxu0 %v159
    %214 = vmatprep.subr.bf16.mxu0 0
    %215 = vmatpush1.bf16.msra.mxu0 %v160
    %216 = vmatprep.subr.bf16.mxu0 0
    %217 = vmatpush1.bf16.msra.mxu0 0
    %218 = vmatprep.subr.bf16.mxu0 0
    %219 = vmatpush1.bf16.msra.mxu0 0
    %220 = vmatprep.subr.bf16.mxu0 0
    %221 = vmatpush1.bf16.msra.mxu0 0
    %222 = vmatprep.subr.bf16.mxu0 0
    %223 = vmatpush1.bf16.msra.mxu0 0
    %224 = vmatprep.subr.bf16.mxu0 0
    %225 = vmatpush1.bf16.msra.mxu0 0
    %226 = vmatprep.subr.bf16.mxu0 0
    %227 = vmatpush1.bf16.msra.mxu0 0
    %228 = vmatprep.subr.bf16.mxu0 0
    %229 = vmatpush1.bf16.msra.mxu0 0
    %230 = vmatprep.subr.bf16.mxu0 0
    %231 = vmatpush1.bf16.msra.mxu0 0
    %232 = vmatprep.subr.bf16.mxu0 0
    %233 = vmatpush1.bf16.msra.mxu0 0
    %234 = vmatprep.subr.bf16.mxu0 0
    %235 = vmatpush1.bf16.msra.mxu0 0
    %236 = vmatprep.subr.bf16.mxu0 0
    %237 = vmatpush1.bf16.msra.mxu0 0
    %238 = vmatprep.subr.bf16.mxu0 0
    %239 = vmatpush1.bf16.msra.mxu0 0
    %240 = vmatprep.subr.bf16.mxu0 0
    %241 = vmatpush1.bf16.msra.mxu0 0
    %242 = vmatprep.subr.bf16.mxu0 0
    %243 = vmatpush1.bf16.msra.mxu0 0
    %244 = vmatprep.mubr.bf16.mxu0 0
    %245 = vmatmul.mubr.bf16.gmra.mrb[0].mxu0 %v165
    %v246 = vpop.f32.mrb[0].mxu0
    %v247 = vadd.f32 %v69, %v246
    %v248 = vpop.f32.mrb[0].mxu0
    %v249 = vpop.f32.mrb[0].mxu0
    %v250 = vadd.f32 %v69, %v249
    %v251 = vpop.f32.mrb[0].mxu0
    %252 = vmatprep.mubr.bf16.mxu0 0
    %253 = vmatmul.mubr.bf16.gmra.mrb[0].mxu0 %v168
    %v254 = vpop.f32.mrb[0].mxu0
    %v255 = vadd.f32 %v69, %v254
    %v256 = vpop.f32.mrb[0].mxu0
    %v257 = vpop.f32.mrb[0].mxu0
    %v258 = vadd.f32 %v69, %v257
    %v259 = vpop.f32.mrb[0].mxu0
    %260 = vmatprep.mubr.bf16.mxu0 0
    %261 = vmatmul.mubr.bf16.gmra.mrb[0].mxu0 %v171
    %v262 = vpop.f32.mrb[0].mxu0
    %v263 = vadd.f32 %v69, %v262
    %v264 = vpop.f32.mrb[0].mxu0
    %v265 = vpop.f32.mrb[0].mxu0
    %v266 = vadd.f32 %v69, %v265
    %v267 = vpop.f32.mrb[0].mxu0
    %268 = vmatprep.mubr.bf16.mxu0 0
    %269 = vmatmul.mubr.bf16.gmra.mrb[0].mxu0 %v174
    %v270 = vpop.f32.mrb[0].mxu0
    %v271 = vadd.f32 %v69, %v270
    %v272 = vpop.f32.mrb[0].mxu0
    %v273 = vpop.f32.mrb[0].mxu0
    %v274 = vadd.f32 %v69, %v273
    %v275 = vpop.f32.mrb[0].mxu0
    %276 = vmatprep.mubr.bf16.mxu0 0
    %277 = vmatmul.mubr.bf16.gmra.mrb[0].mxu0 %v177
    %v278 = vpop.f32.mrb[0].mxu0
    %v279 = vadd.f32 %v69, %v278
    %v280 = vpop.f32.mrb[0].mxu0
    %v281 = vpop.f32.mrb[0].mxu0
    %v282 = vadd.f32 %v69, %v281
    %v283 = vpop.f32.mrb[0].mxu0
    %284 = vmatprep.mubr.bf16.mxu0 0
    %285 = vmatmul.mubr.bf16.gmra.mrb[0].mxu0 %v180
    %v286 = vpop.f32.mrb[0].mxu0
    %v287 = vadd.f32 %v69, %v286
    %v288 = vpop.f32.mrb[0].mxu0
    %v289 = vpop.f32.mrb[0].mxu0
    %v290 = vadd.f32 %v69, %v289
    %v291 = vpop.f32.mrb[0].mxu0
    %292 = vmatprep.mubr.bf16.mxu0 0
    %293 = vmatmul.mubr.bf16.gmra.mrb[0].mxu0 %v183
    %v294 = vpop.f32.mrb[0].mxu0
    %v295 = vadd.f32 %v69, %v294
    %v296 = vpop.f32.mrb[0].mxu0
    %v297 = vpop.f32.mrb[0].mxu0
    %v298 = vadd.f32 %v69, %v297
    %v299 = vpop.f32.mrb[0].mxu0
    %300 = vmatprep.mubr.bf16.mxu0 0
    %301 = vmatmul.mubr.bf16.gmra.mrb[0].mxu0 %v186
    %v302 = vpop.f32.mrb[0].mxu0
    %v303 = vadd.f32 %v69, %v302
    %v304 = vpop.f32.mrb[0].mxu0
    %v305 = vpop.f32.mrb[0].mxu0
    %v306 = vadd.f32 %v69, %v305
    %v307 = vpop.f32.mrb[0].mxu0
    %308 = vmatprep.mubr.bf16.mxu0 0
    %309 = vmatmul.mubr.bf16.gmra.mrb[0].mxu0 %v189
    %v310 = vpop.f32.mrb[0].mxu0
    %v311 = vadd.f32 %v69, %v310
    %v312 = vpop.f32.mrb[0].mxu0
    %v313 = vpop.f32.mrb[0].mxu0
    %v314 = vadd.f32 %v69, %v313
    %v315 = vpop.f32.mrb[0].mxu0
    %316 = vmatprep.mubr.bf16.mxu0 0
    %317 = vmatmul.mubr.bf16.gmra.mrb[0].mxu0 %v192
    %v318 = vpop.f32.mrb[0].mxu0
    %v319 = vadd.f32 %v69, %v318
    %v320 = vpop.f32.mrb[0].mxu0
    %v321 = vpop.f32.mrb[0].mxu0
    %v322 = vadd.f32 %v69, %v321
    %v323 = vpop.f32.mrb[0].mxu0
    %324 = vmatprep.mubr.bf16.mxu0 0
    %325 = vmatmul.mubr.bf16.gmra.mrb[0].mxu0 %v195
    %v326 = vpop.f32.mrb[0].mxu0
    %v327 = vadd.f32 %v69, %v326
    %v328 = vpop.f32.mrb[0].mxu0
    %v329 = vpop.f32.mrb[0].mxu0
    %v330 = vadd.f32 %v69, %v329
    %v331 = vpop.f32.mrb[0].mxu0
    %332 = vmatprep.mubr.bf16.mxu0 0
    %333 = vmatmul.mubr.bf16.gmra.mrb[0].mxu0 %v198
    %v334 = vpop.f32.mrb[0].mxu0
    %v335 = vadd.f32 %v69, %v334
    %v336 = vpop.f32.mrb[0].mxu0
    %v337 = vpop.f32.mrb[0].mxu0
    %v338 = vadd.f32 %v69, %v337
    %v339 = vpop.f32.mrb[0].mxu0
    %340 = vmatprep.mubr.bf16.mxu0 0
    %341 = vmatmul.mubr.bf16.gmra.mrb[0].mxu0 %v201
    %v342 = vpop.f32.mrb[0].mxu0
    %v343 = vadd.f32 %v69, %v342
    %v344 = vpop.f32.mrb[0].mxu0
    %v345 = vpop.f32.mrb[0].mxu0
    %v346 = vadd.f32 %v69, %v345
    %v347 = vpop.f32.mrb[0].mxu0
    %348 = vmatprep.mubr.bf16.mxu0 0
    %349 = vmatmul.mubr.bf16.gmra.mrb[0].mxu0 %v204
    %v350 = vpop.f32.mrb[0].mxu0
    %v351 = vadd.f32 %v69, %v350
    %v352 = vpop.f32.mrb[0].mxu0
    %v353 = vpop.f32.mrb[0].mxu0
    %v354 = vadd.f32 %v69, %v353
    %v355 = vpop.f32.mrb[0].mxu0
    %356 = vmatprep.mubr.bf16.mxu0 0
    %357 = vmatmul.mubr.bf16.gmra.mrb[0].mxu0 %v207
    %v358 = vpop.f32.mrb[0].mxu0
    %v359 = vadd.f32 %v69, %v358
    %v360 = vpop.f32.mrb[0].mxu0
    %v361 = vpop.f32.mrb[0].mxu0
    %v362 = vadd.f32 %v69, %v361
    %v363 = vpop.f32.mrb[0].mxu0
    %364 = vmatprep.mubr.bf16.mxu0 0
    %365 = vmatmul.mubr.bf16.gmra.mrb[0].mxu0 %v210
    %v366 = vpop.f32.mrb[0].mxu0
    %v367 = vadd.f32 %v69, %v366
    %v368 = vpop.f32.mrb[0].mxu0
    %v369 = vpop.f32.mrb[0].mxu0
    %v370 = vadd.f32 %v69, %v369
    %v371 = vpop.f32.mrb[0].mxu0
    %372 = vdwg.mxu0
    %v373 = vtanh.pop %v247
    %v374 = vtanh.pop %v250
    %v375 = vtanh.pop %v255
    %v376 = vtanh.pop %v258
    %v377 = vtanh.pop %v263
    %v378 = vtanh.pop %v266
    %v379 = vtanh.pop %v271
    %v380 = vtanh.pop %v274
    %v381 = vtanh.pop %v279
    %v382 = vtanh.pop %v282
    %v383 = vtanh.pop %v287
    %v384 = vtanh.pop %v290
    %v385 = vtanh.pop %v295
    %v386 = vtanh.pop %v298
    %v387 = vtanh.pop %v303
    %v388 = vtanh.pop %v306
    %v389 = vtanh.pop %v311
    %v390 = vtanh.pop %v314
    %v391 = vtanh.pop %v319
    %v392 = vtanh.pop %v322
    %v393 = vtanh.pop %v327
    %v394 = vtanh.pop %v330
    %v395 = vtanh.pop %v335
    %v396 = vtanh.pop %v338
    %v397 = vtanh.pop %v343
    %v398 = vtanh.pop %v346
    %v399 = vtanh.pop %v351
    %v400 = vtanh.pop %v354
    %v401 = vtanh.pop %v359
    %v402 = vtanh.pop %v362
    %v403 = vtanh.pop %v367
    %v404 = vtanh.pop %v370
    %v405 = vpack.c.bf16 %v374, %v373
    %v406 = vpack.c.bf16 %v376, %v375
    %v407 = vpack.c.bf16 %v378, %v377
    %v408 = vpack.c.bf16 %v380, %v379
    %v409 = vpack.c.bf16 %v382, %v381
    %v410 = vpack.c.bf16 %v384, %v383
    %v411 = vpack.c.bf16 %v386, %v385
    %v412 = vpack.c.bf16 %v388, %v387
    %v413 = vpack.c.bf16 %v390, %v389
    %v414 = vpack.c.bf16 %v392, %v391
    %v415 = vpack.c.bf16 %v394, %v393
    %v416 = vpack.c.bf16 %v396, %v395
    %v417 = vpack.c.bf16 %v398, %v397
    %v418 = vpack.c.bf16 %v400, %v399
    %v419 = vpack.c.bf16 %v402, %v401
    %v420 = vpack.c.bf16 %v404, %v403
    %421 = vst.msk [vmem:[#allocation2] sm:$0xff] %vm163, %v405
    %422 = vst.msk [vmem:[#allocation2 + $0x8] sm:$0xff] %vm163, %v406
    %423 = vst.msk [vmem:[#allocation2 + $0x10] sm:$0xff] %vm163, %v407
    %424 = vst.msk [vmem:[#allocation2 + $0x18] sm:$0xff] %vm163, %v408
    %425 = vst.msk [vmem:[#allocation2 + $0x20] sm:$0xff] %vm163, %v409
    %426 = vst.msk [vmem:[#allocation2 + $0x28] sm:$0xff] %vm163, %v410
    %427 = vst.msk [vmem:[#allocation2 + $0x30] sm:$0xff] %vm163, %v411
    %428 = vst.msk [vmem:[#allocation2 + $0x38] sm:$0xff] %vm163, %v412
    %429 = vst.msk [vmem:[#allocation2 + $0x40] sm:$0xff] %vm163, %v413
    %430 = vst.msk [vmem:[#allocation2 + $0x48] sm:$0xff] %vm163, %v414
    %431 = vst.msk [vmem:[#allocation2 + $0x50] sm:$0xff] %vm163, %v415
    %432 = vst.msk [vmem:[#allocation2 + $0x58] sm:$0xff] %vm163, %v416
    %433 = vst.msk [vmem:[#allocation2 + $0x60] sm:$0xff] %vm163, %v417
    %434 = vst.msk [vmem:[#allocation2 + $0x68] sm:$0xff] %vm163, %v418
    %435 = vst.msk [vmem:[#allocation2 + $0x70] sm:$0xff] %vm163, %v419
    %436 = vst.msk [vmem:[#allocation2 + $0x78] sm:$0xff] %vm163, %v420
    %vm437 = vcmask 7168
    %438 = vst.msk [vmem:[#allocation3] sm:$0xff] %vm437, -inf
    %439 = vst.msk [vmem:[#allocation3 + $0x8] sm:$0xff] %vm437, -inf
    %440 = vst.msk [vmem:[#allocation3 + $0x10] sm:$0xff] %vm437, -inf
    %441 = vst.msk [vmem:[#allocation3 + $0x18] sm:$0xff] %vm437, -inf
    %442 = vst.msk [vmem:[#allocation3 + $0x20] sm:$0xff] %vm437, -inf
    %443 = vst.msk [vmem:[#allocation3 + $0x28] sm:$0xff] %vm437, -inf
    %444 = vst.msk [vmem:[#allocation3 + $0x30] sm:$0xff] %vm437, -inf
    %445 = vst.msk [vmem:[#allocation3 + $0x38] sm:$0xff] %vm437, -inf
    %446 = vst.msk [vmem:[#allocation3 + $0x40] sm:$0xff] %vm437, -inf
    %447 = vst.msk [vmem:[#allocation3 + $0x48] sm:$0xff] %vm437, -inf
    %448 = vst.msk [vmem:[#allocation3 + $0x50] sm:$0xff] %vm437, -inf
    %449 = vst.msk [vmem:[#allocation3 + $0x58] sm:$0xff] %vm437, -inf
    %450 = vst.msk [vmem:[#allocation3 + $0x60] sm:$0xff] %vm437, -inf
    %451 = vst.msk [vmem:[#allocation3 + $0x68] sm:$0xff] %vm437, -inf
    %452 = vst.msk [vmem:[#allocation3 + $0x70] sm:$0xff] %vm437, -inf
    %453 = vst.msk [vmem:[#allocation3 + $0x78] sm:$0xff] %vm437, -inf
    %454 = vst.msk [vmem:[#allocation3 + $0x80] sm:$0xff] %vm437, -inf
    %455 = vst.msk [vmem:[#allocation3 + $0x88] sm:$0xff] %vm437, -inf
    %456 = vst.msk [vmem:[#allocation3 + $0x90] sm:$0xff] %vm437, -inf
    %457 = vst.msk [vmem:[#allocation3 + $0x98] sm:$0xff] %vm437, -inf
    %458 = vst.msk [vmem:[#allocation3 + $0xa0] sm:$0xff] %vm437, -inf
    %459 = vst.msk [vmem:[#allocation3 + $0xa8] sm:$0xff] %vm437, -inf
    %460 = vst.msk [vmem:[#allocation3 + $0xb0] sm:$0xff] %vm437, -inf
    %461 = vst.msk [vmem:[#allocation3 + $0xb8] sm:$0xff] %vm437, -inf
    %462 = vst.msk [vmem:[#allocation3 + $0xc0] sm:$0xff] %vm437, -inf
    %463 = vst.msk [vmem:[#allocation3 + $0xc8] sm:$0xff] %vm437, -inf
    %464 = vst.msk [vmem:[#allocation3 + $0xd0] sm:$0xff] %vm437, -inf
    %465 = vst.msk [vmem:[#allocation3 + $0xd8] sm:$0xff] %vm437, -inf
    %466 = vst.msk [vmem:[#allocation3 + $0xe0] sm:$0xff] %vm437, -inf
    %467 = vst.msk [vmem:[#allocation3 + $0xe8] sm:$0xff] %vm437, -inf
    %468 = vst.msk [vmem:[#allocation3 + $0xf0] sm:$0xff] %vm437, -inf
    %469 = vst.msk [vmem:[#allocation3 + $0xf8] sm:$0xff] %vm437, -inf
    %470 = vst.msk [vmem:[#allocation4] sm:$0xff] %vm437, 0.0
    %471 = vst.msk [vmem:[#allocation4 + $0x8] sm:$0xff] %vm437, 0.0
    %472 = vst.msk [vmem:[#allocation4 + $0x10] sm:$0xff] %vm437, 0.0
    %473 = vst.msk [vmem:[#allocation4 + $0x18] sm:$0xff] %vm437, 0.0
    %474 = vst.msk [vmem:[#allocation4 + $0x20] sm:$0xff] %vm437, 0.0
    %475 = vst.msk [vmem:[#allocation4 + $0x28] sm:$0xff] %vm437, 0.0
    %476 = vst.msk [vmem:[#allocation4 + $0x30] sm:$0xff] %vm437, 0.0
    %477 = vst.msk [vmem:[#allocation4 + $0x38] sm:$0xff] %vm437, 0.0
    %478 = vst.msk [vmem:[#allocation4 + $0x40] sm:$0xff] %vm437, 0.0
    %479 = vst.msk [vmem:[#allocation4 + $0x48] sm:$0xff] %vm437, 0.0
    %480 = vst.msk [vmem:[#allocation4 + $0x50] sm:$0xff] %vm437, 0.0
    %481 = vst.msk [vmem:[#allocation4 + $0x58] sm:$0xff] %vm437, 0.0
    %482 = vst.msk [vmem:[#allocation4 + $0x60] sm:$0xff] %vm437, 0.0
    %483 = vst.msk [vmem:[#allocation4 + $0x68] sm:$0xff] %vm437, 0.0
    %484 = vst.msk [vmem:[#allocation4 + $0x70] sm:$0xff] %vm437, 0.0
    %485 = vst.msk [vmem:[#allocation4 + $0x78] sm:$0xff] %vm437, 0.0
    %486 = vst.msk [vmem:[#allocation4 + $0x80] sm:$0xff] %vm437, 0.0
    %487 = vst.msk [vmem:[#allocation4 + $0x88] sm:$0xff] %vm437, 0.0
    %488 = vst.msk [vmem:[#allocation4 + $0x90] sm:$0xff] %vm437, 0.0
    %489 = vst.msk [vmem:[#allocation4 + $0x98] sm:$0xff] %vm437, 0.0
    %490 = vst.msk [vmem:[#allocation4 + $0xa0] sm:$0xff] %vm437, 0.0
    %491 = vst.msk [vmem:[#allocation4 + $0xa8] sm:$0xff] %vm437, 0.0
    %492 = vst.msk [vmem:[#allocation4 + $0xb0] sm:$0xff] %vm437, 0.0
    %493 = vst.msk [vmem:[#allocation4 + $0xb8] sm:$0xff] %vm437, 0.0
    %494 = vst.msk [vmem:[#allocation4 + $0xc0] sm:$0xff] %vm437, 0.0
    %495 = vst.msk [vmem:[#allocation4 + $0xc8] sm:$0xff] %vm437, 0.0
    %496 = vst.msk [vmem:[#allocation4 + $0xd0] sm:$0xff] %vm437, 0.0
    %497 = vst.msk [vmem:[#allocation4 + $0xd8] sm:$0xff] %vm437, 0.0
    %498 = vst.msk [vmem:[#allocation4 + $0xe0] sm:$0xff] %vm437, 0.0
    %499 = vst.msk [vmem:[#allocation4 + $0xe8] sm:$0xff] %vm437, 0.0
    %500 = vst.msk [vmem:[#allocation4 + $0xf0] sm:$0xff] %vm437, 0.0
    %501 = vst.msk [vmem:[#allocation4 + $0xf8] sm:$0xff] %vm437, 0.0
    %502 = vst.msk [vmem:[#allocation5] sm:$0xff] %vm437, 0.0
    %503 = vst.msk [vmem:[#allocation5 + $0x8] sm:$0xff] %vm437, 0.0
    %504 = vst.msk [vmem:[#allocation5 + $0x10] sm:$0xff] %vm437, 0.0
    %505 = vst.msk [vmem:[#allocation5 + $0x18] sm:$0xff] %vm437, 0.0
    %506 = vst.msk [vmem:[#allocation5 + $0x20] sm:$0xff] %vm437, 0.0
    %507 = vst.msk [vmem:[#allocation5 + $0x28] sm:$0xff] %vm437, 0.0
    %508 = vst.msk [vmem:[#allocation5 + $0x30] sm:$0xff] %vm437, 0.0
    %509 = vst.msk [vmem:[#allocation5 + $0x38] sm:$0xff] %vm437, 0.0
    %510 = vst.msk [vmem:[#allocation5 + $0x40] sm:$0xff] %vm437, 0.0
    %511 = vst.msk [vmem:[#allocation5 + $0x48] sm:$0xff] %vm437, 0.0
    %512 = vst.msk [vmem:[#allocation5 + $0x50] sm:$0xff] %vm437, 0.0
    %513 = vst.msk [vmem:[#allocation5 + $0x58] sm:$0xff] %vm437, 0.0
    %514 = vst.msk [vmem:[#allocation5 + $0x60] sm:$0xff] %vm437, 0.0
    %515 = vst.msk [vmem:[#allocation5 + $0x68] sm:$0xff] %vm437, 0.0
    %516 = vst.msk [vmem:[#allocation5 + $0x70] sm:$0xff] %vm437, 0.0
    %517 = vst.msk [vmem:[#allocation5 + $0x78] sm:$0xff] %vm437, 0.0
    %518 = vst.msk [vmem:[#allocation5 + $0x80] sm:$0xff] %vm437, 0.0
    %519 = vst.msk [vmem:[#allocation5 + $0x88] sm:$0xff] %vm437, 0.0
    %520 = vst.msk [vmem:[#allocation5 + $0x90] sm:$0xff] %vm437, 0.0
    %521 = vst.msk [vmem:[#allocation5 + $0x98] sm:$0xff] %vm437, 0.0
    %522 = vst.msk [vmem:[#allocation5 + $0xa0] sm:$0xff] %vm437, 0.0
    %523 = vst.msk [vmem:[#allocation5 + $0xa8] sm:$0xff] %vm437, 0.0
    %524 = vst.msk [vmem:[#allocation5 + $0xb0] sm:$0xff] %vm437, 0.0
    %525 = vst.msk [vmem:[#allocation5 + $0xb8] sm:$0xff] %vm437, 0.0
    %526 = vst.msk [vmem:[#allocation5 + $0xc0] sm:$0xff] %vm437, 0.0
    %527 = vst.msk [vmem:[#allocation5 + $0xc8] sm:$0xff] %vm437, 0.0
    %528 = vst.msk [vmem:[#allocation5 + $0xd0] sm:$0xff] %vm437, 0.0
    %529 = vst.msk [vmem:[#allocation5 + $0xd8] sm:$0xff] %vm437, 0.0
    %530 = vst.msk [vmem:[#allocation5 + $0xe0] sm:$0xff] %vm437, 0.0
    %531 = vst.msk [vmem:[#allocation5 + $0xe8] sm:$0xff] %vm437, 0.0
    %532 = vst.msk [vmem:[#allocation5 + $0xf0] sm:$0xff] %vm437, 0.0
    %533 = vst.msk [vmem:[#allocation5 + $0xf8] sm:$0xff] %vm437, 0.0
  $region29: #{tpu_custom_call.1} parent=0 // pred_fallthru
    _
  %v534 = vld [vmem:[#allocation2] sm:$0xff]
  %v535 = vld [vmem:[#allocation2 + $0x8] sm:$0xff]
  %v536 = vld [vmem:[#allocation2 + $0x10] sm:$0xff]
  %v537 = vld [vmem:[#allocation2 + $0x18] sm:$0xff]
  %v538 = vld [vmem:[#allocation2 + $0x20] sm:$0xff]
  %v539 = vld [vmem:[#allocation2 + $0x28] sm:$0xff]
  %v540 = vld [vmem:[#allocation2 + $0x30] sm:$0xff]
  %v541 = vld [vmem:[#allocation2 + $0x38] sm:$0xff]
  %v542 = vld [vmem:[#allocation2 + $0x40] sm:$0xff]
  %v543 = vld [vmem:[#allocation2 + $0x48] sm:$0xff]
  %v544 = vld [vmem:[#allocation2 + $0x50] sm:$0xff]
  %v545 = vld [vmem:[#allocation2 + $0x58] sm:$0xff]
  %v546 = vld [vmem:[#allocation2 + $0x60] sm:$0xff]
  %v547 = vld [vmem:[#allocation2 + $0x68] sm:$0xff]
  %v548 = vld [vmem:[#allocation2 + $0x70] sm:$0xff]
  %v549 = vld [vmem:[#allocation2 + $0x78] sm:$0xff]
  %v550 = vld [vmem:[%s3] sm:$0xf]
  %v551 = vld [vmem:[%s3 + $0x4] sm:$0xf]
  %v552 = vld [vmem:[%s3 + $0x8] sm:$0xf]
  %v553 = vld [vmem:[%s3 + $0xc] sm:$0xf]
  %v554 = vld [vmem:[%s4] sm:$0x1]
  %v556 = vlaneseq
  %v557 = vshrl.u32 %v556, 7
  %v558 = vsub.s32 0, %v557
  %v559 = vrot.slane %v554, %v558
  %v565 = vunpack.c.l.b16 %v550
  %v566 = vunpack.c.l.b16 %v551
  %v567 = vunpack.c.l.b16 %v552
  %v568 = vunpack.c.l.b16 %v553
  %v569 = vpack.c.b16 %v566, %v565
  %v570 = vpack.c.b16 %v568, %v567
  %vm573 = vcmask 261120
  %v575 = vsel %vm573, %v534, 0
  %v578 = vsel %vm573, %v535, 0
  %v581 = vsel %vm573, %v536, 0
  %v584 = vsel %vm573, %v537, 0
  %v587 = vsel %vm573, %v538, 0
  %v590 = vsel %vm573, %v539, 0
  %v593 = vsel %vm573, %v540, 0
  %v596 = vsel %vm573, %v541, 0
  %v599 = vsel %vm573, %v542, 0
  %v602 = vsel %vm573, %v543, 0
  %v605 = vsel %vm573, %v544, 0
  %v608 = vsel %vm573, %v545, 0
  %v611 = vsel %vm573, %v546, 0
  %v614 = vsel %vm573, %v547, 0
  %v617 = vsel %vm573, %v548, 0
  %v620 = vsel %vm573, %v549, 0
  %622 = vmatprep.subr.bf16.mxu0 0
  %623 = vmatpush1.bf16.msra.mxu0 %v569
  %624 = vmatprep.subr.bf16.mxu0 0
  %625 = vmatpush1.bf16.msra.mxu0 %v570
  %626 = vmatprep.subr.bf16.mxu0 0
  %627 = vmatpush1.bf16.msra.mxu0 0
  %628 = vmatprep.subr.bf16.mxu0 0
  %629 = vmatpush1.bf16.msra.mxu0 0
  %630 = vmatprep.subr.bf16.mxu0 0
  %631 = vmatpush1.bf16.msra.mxu0 0
  %632 = vmatprep.subr.bf16.mxu0 0
  %633 = vmatpush1.bf16.msra.mxu0 0
  %634 = vmatprep.subr.bf16.mxu0 0
  %635 = vmatpush1.bf16.msra.mxu0 0
  %636 = vmatprep.subr.bf16.mxu0 0
  %637 = vmatpush1.bf16.msra.mxu0 0
  %638 = vmatprep.subr.bf16.mxu0 0
  %639 = vmatpush1.bf16.msra.mxu0 0
  %640 = vmatprep.subr.bf16.mxu0 0
  %641 = vmatpush1.bf16.msra.mxu0 0
  %642 = vmatprep.subr.bf16.mxu0 0
  %643 = vmatpush1.bf16.msra.mxu0 0
  %644 = vmatprep.subr.bf16.mxu0 0
  %645 = vmatpush1.bf16.msra.mxu0 0
  %646 = vmatprep.subr.bf16.mxu0 0
  %647 = vmatpush1.bf16.msra.mxu0 0
  %648 = vmatprep.subr.bf16.mxu0 0
  %649 = vmatpush1.bf16.msra.mxu0 0
  %650 = vmatprep.subr.bf16.mxu0 0
  %651 = vmatpush1.bf16.msra.mxu0 0
  %652 = vmatprep.subr.bf16.mxu0 0
  %653 = vmatpush1.bf16.msra.mxu0 0
  %654 = vmatprep.mubr.bf16.mxu0 0
  %655 = vmatmul.mubr.bf16.gmra.mrb[0].mxu0 %v575
  %v656 = vpop.f32.mrb[0].mxu0
  %v657 = vadd.f32 %v559, %v656
  %v658 = vpop.f32.mrb[0].mxu0
  %v659 = vpop.f32.mrb[0].mxu0
  %v660 = vadd.f32 %v559, %v659
  %v661 = vpop.f32.mrb[0].mxu0
  %662 = vmatprep.mubr.bf16.mxu0 0
  %663 = vmatmul.mubr.bf16.gmra.mrb[0].mxu0 %v578
  %v664 = vpop.f32.mrb[0].mxu0
  %v665 = vadd.f32 %v559, %v664
  %v666 = vpop.f32.mrb[0].mxu0
  %v667 = vpop.f32.mrb[0].mxu0
  %v668 = vadd.f32 %v559, %v667
  %v669 = vpop.f32.mrb[0].mxu0
  %670 = vmatprep.mubr.bf16.mxu0 0
  %671 = vmatmul.mubr.bf16.gmra.mrb[0].mxu0 %v581
  %v672 = vpop.f32.mrb[0].mxu0
  %v673 = vadd.f32 %v559, %v672
  %v674 = vpop.f32.mrb[0].mxu0
  %v675 = vpop.f32.mrb[0].mxu0
  %v676 = vadd.f32 %v559, %v675
  %v677 = vpop.f32.mrb[0].mxu0
  %678 = vmatprep.mubr.bf16.mxu0 0
  %679 = vmatmul.mubr.bf16.gmra.mrb[0].mxu0 %v584
  %v680 = vpop.f32.mrb[0].mxu0
  %v681 = vadd.f32 %v559, %v680
  %v682 = vpop.f32.mrb[0].mxu0
  %v683 = vpop.f32.mrb[0].mxu0
  %v684 = vadd.f32 %v559, %v683
  %v685 = vpop.f32.mrb[0].mxu0
  %686 = vmatprep.mubr.bf16.mxu0 0
  %687 = vmatmul.mubr.bf16.gmra.mrb[0].mxu0 %v587
  %v688 = vpop.f32.mrb[0].mxu0
  %v689 = vadd.f32 %v559, %v688
  %v690 = vpop.f32.mrb[0].mxu0
  %v691 = vpop.f32.mrb[0].mxu0
  %v692 = vadd.f32 %v559, %v691
  %v693 = vpop.f32.mrb[0].mxu0
  %694 = vmatprep.mubr.bf16.mxu0 0
  %695 = vmatmul.mubr.bf16.gmra.mrb[0].mxu0 %v590
  %v696 = vpop.f32.mrb[0].mxu0
  %v697 = vadd.f32 %v559, %v696
  %v698 = vpop.f32.mrb[0].mxu0
  %v699 = vpop.f32.mrb[0].mxu0
  %v700 = vadd.f32 %v559, %v699
  %v701 = vpop.f32.mrb[0].mxu0
  %702 = vmatprep.mubr.bf16.mxu0 0
  %703 = vmatmul.mubr.bf16.gmra.mrb[0].mxu0 %v593
  %v704 = vpop.f32.mrb[0].mxu0
  %v705 = vadd.f32 %v559, %v704
  %v706 = vpop.f32.mrb[0].mxu0
  %v707 = vpop.f32.mrb[0].mxu0
  %v708 = vadd.f32 %v559, %v707
  %v709 = vpop.f32.mrb[0].mxu0
  %710 = vmatprep.mubr.bf16.mxu0 0
  %711 = vmatmul.mubr.bf16.gmra.mrb[0].mxu0 %v596
  %v712 = vpop.f32.mrb[0].mxu0
  %v713 = vadd.f32 %v559, %v712
  %v714 = vpop.f32.mrb[0].mxu0
  %v715 = vpop.f32.mrb[0].mxu0
  %v716 = vadd.f32 %v559, %v715
  %v717 = vpop.f32.mrb[0].mxu0
  %718 = vmatprep.mubr.bf16.mxu0 0
  %719 = vmatmul.mubr.bf16.gmra.mrb[0].mxu0 %v599
  %v720 = vpop.f32.mrb[0].mxu0
  %v721 = vadd.f32 %v559, %v720
  %v722 = vpop.f32.mrb[0].mxu0
  %v723 = vpop.f32.mrb[0].mxu0
  %v724 = vadd.f32 %v559, %v723
  %v725 = vpop.f32.mrb[0].mxu0
  %726 = vmatprep.mubr.bf16.mxu0 0
  %727 = vmatmul.mubr.bf16.gmra.mrb[0].mxu0 %v602
  %v728 = vpop.f32.mrb[0].mxu0
  %v729 = vadd.f32 %v559, %v728
  %v730 = vpop.f32.mrb[0].mxu0
  %v731 = vpop.f32.mrb[0].mxu0
  %v732 = vadd.f32 %v559, %v731
  %v733 = vpop.f32.mrb[0].mxu0
  %734 = vmatprep.mubr.bf16.mxu0 0
  %735 = vmatmul.mubr.bf16.gmra.mrb[0].mxu0 %v605
  %v736 = vpop.f32.mrb[0].mxu0
  %v737 = vadd.f32 %v559, %v736
  %v738 = vpop.f32.mrb[0].mxu0
  %v739 = vpop.f32.mrb[0].mxu0
  %v740 = vadd.f32 %v559, %v739
  %v741 = vpop.f32.mrb[0].mxu0
  %742 = vmatprep.mubr.bf16.mxu0 0
  %743 = vmatmul.mubr.bf16.gmra.mrb[0].mxu0 %v608
  %v744 = vpop.f32.mrb[0].mxu0
  %v745 = vadd.f32 %v559, %v744
  %v746 = vpop.f32.mrb[0].mxu0
  %v747 = vpop.f32.mrb[0].mxu0
  %v748 = vadd.f32 %v559, %v747
  %v749 = vpop.f32.mrb[0].mxu0
  %750 = vmatprep.mubr.bf16.mxu0 0
  %751 = vmatmul.mubr.bf16.gmra.mrb[0].mxu0 %v611
  %v752 = vpop.f32.mrb[0].mxu0
  %v753 = vadd.f32 %v559, %v752
  %v754 = vpop.f32.mrb[0].mxu0
  %v755 = vpop.f32.mrb[0].mxu0
  %v756 = vadd.f32 %v559, %v755
  %v757 = vpop.f32.mrb[0].mxu0
  %758 = vmatprep.mubr.bf16.mxu0 0
  %759 = vmatmul.mubr.bf16.gmra.mrb[0].mxu0 %v614
  %v760 = vpop.f32.mrb[0].mxu0
  %v761 = vadd.f32 %v559, %v760
  %v762 = vpop.f32.mrb[0].mxu0
  %v763 = vpop.f32.mrb[0].mxu0
  %v764 = vadd.f32 %v559, %v763
  %v765 = vpop.f32.mrb[0].mxu0
  %766 = vmatprep.mubr.bf16.mxu0 0
  %767 = vmatmul.mubr.bf16.gmra.mrb[0].mxu0 %v617
  %v768 = vpop.f32.mrb[0].mxu0
  %v769 = vadd.f32 %v559, %v768
  %v770 = vpop.f32.mrb[0].mxu0
  %v771 = vpop.f32.mrb[0].mxu0
  %v772 = vadd.f32 %v559, %v771
  %v773 = vpop.f32.mrb[0].mxu0
  %774 = vmatprep.mubr.bf16.mxu0 0
  %775 = vmatmul.mubr.bf16.gmra.mrb[0].mxu0 %v620
  %v776 = vpop.f32.mrb[0].mxu0
  %v777 = vadd.f32 %v559, %v776
  %v778 = vpop.f32.mrb[0].mxu0
  %v779 = vpop.f32.mrb[0].mxu0
  %v780 = vadd.f32 %v559, %v779
  %v781 = vpop.f32.mrb[0].mxu0
  %782 = vdwg.mxu0
  %v783 = vlaneseq
  %v784 = vand.u32 %v783, 127
  %s785 = smul.u32 0, 128
  %v786 = vstv %s785
  %v787 = vadd.s32 %v784, %v786
  %v788 = vld [vmem:[#allocation5] sm:$0xff]
  %v789 = vld [vmem:[#allocation5 + $0x8] sm:$0xff]
  %v790 = vld [vmem:[#allocation5 + $0x10] sm:$0xff]
  %v791 = vld [vmem:[#allocation5 + $0x18] sm:$0xff]
  %v792 = vld [vmem:[#allocation5 + $0x20] sm:$0xff]
  %v793 = vld [vmem:[#allocation5 + $0x28] sm:$0xff]
  %v794 = vld [vmem:[#allocation5 + $0x30] sm:$0xff]
  %v795 = vld [vmem:[#allocation5 + $0x38] sm:$0xff]
  %v796 = vld [vmem:[#allocation5 + $0x40] sm:$0xff]
  %v797 = vld [vmem:[#allocation5 + $0x48] sm:$0xff]
  %v798 = vld [vmem:[#allocation5 + $0x50] sm:$0xff]
  %v799 = vld [vmem:[#allocation5 + $0x58] sm:$0xff]
  %v800 = vld [vmem:[#allocation5 + $0x60] sm:$0xff]
  %v801 = vld [vmem:[#allocation5 + $0x68] sm:$0xff]
  %v802 = vld [vmem:[#allocation5 + $0x70] sm:$0xff]
  %v803 = vld [vmem:[#allocation5 + $0x78] sm:$0xff]
  %v804 = vld [vmem:[#allocation5 + $0x80] sm:$0xff]
  %v805 = vld [vmem:[#allocation5 + $0x88] sm:$0xff]
  %v806 = vld [vmem:[#allocation5 + $0x90] sm:$0xff]
  %v807 = vld [vmem:[#allocation5 + $0x98] sm:$0xff]
  %v808 = vld [vmem:[#allocation5 + $0xa0] sm:$0xff]
  %v809 = vld [vmem:[#allocation5 + $0xa8] sm:$0xff]
  %v810 = vld [vmem:[#allocation5 + $0xb0] sm:$0xff]
  %v811 = vld [vmem:[#allocation5 + $0xb8] sm:$0xff]
  %v812 = vld [vmem:[#allocation5 + $0xc0] sm:$0xff]
  %v813 = vld [vmem:[#allocation5 + $0xc8] sm:$0xff]
  %v814 = vld [vmem:[#allocation5 + $0xd0] sm:$0xff]
  %v815 = vld [vmem:[#allocation5 + $0xd8] sm:$0xff]
  %v816 = vld [vmem:[#allocation5 + $0xe0] sm:$0xff]
  %v817 = vld [vmem:[#allocation5 + $0xe8] sm:$0xff]
  %v818 = vld [vmem:[#allocation5 + $0xf0] sm:$0xff]
  %v819 = vld [vmem:[#allocation5 + $0xf8] sm:$0xff]
  %v820 = vld [vmem:[%s5] sm:$0xff]
  %v821 = vld [vmem:[%s5 + $0x8] sm:$0xff]
  %v822 = vld [vmem:[%s5 + $0x10] sm:$0xff]
  %v823 = vld [vmem:[%s5 + $0x18] sm:$0xff]
  %v824 = vld [vmem:[%s5 + $0x20] sm:$0xff]
  %v825 = vld [vmem:[%s5 + $0x28] sm:$0xff]
  %v826 = vld [vmem:[%s5 + $0x30] sm:$0xff]
  %v827 = vld [vmem:[%s5 + $0x38] sm:$0xff]
  %v828 = vld [vmem:[%s5 + $0x40] sm:$0xff]
  %v829 = vld [vmem:[%s5 + $0x48] sm:$0xff]
  %v830 = vld [vmem:[%s5 + $0x50] sm:$0xff]
  %v831 = vld [vmem:[%s5 + $0x58] sm:$0xff]
  %v832 = vld [vmem:[%s5 + $0x60] sm:$0xff]
  %v833 = vld [vmem:[%s5 + $0x68] sm:$0xff]
  %v834 = vld [vmem:[%s5 + $0x70] sm:$0xff]
  %v835 = vld [vmem:[%s5 + $0x78] sm:$0xff]
  %v836 = vld [vmem:[%s5 + $0x80] sm:$0xff]
  %v837 = vld [vmem:[%s5 + $0x88] sm:$0xff]
  %v838 = vld [vmem:[%s5 + $0x90] sm:$0xff]
  %v839 = vld [vmem:[%s5 + $0x98] sm:$0xff]
  %v840 = vld [vmem:[%s5 + $0xa0] sm:$0xff]
  %v841 = vld [vmem:[%s5 + $0xa8] sm:$0xff]
  %v842 = vld [vmem:[%s5 + $0xb0] sm:$0xff]
  %v843 = vld [vmem:[%s5 + $0xb8] sm:$0xff]
  %v844 = vld [vmem:[%s5 + $0xc0] sm:$0xff]
  %v845 = vld [vmem:[%s5 + $0xc8] sm:$0xff]
  %v846 = vld [vmem:[%s5 + $0xd0] sm:$0xff]
  %v847 = vld [vmem:[%s5 + $0xd8] sm:$0xff]
  %v848 = vld [vmem:[%s5 + $0xe0] sm:$0xff]
  %v849 = vld [vmem:[%s5 + $0xe8] sm:$0xff]
  %v850 = vld [vmem:[%s5 + $0xf0] sm:$0xff]
  %v851 = vld [vmem:[%s5 + $0xf8] sm:$0xff]
  %852 = vset.pattern.permute.xlu0 0
  %853 = vperm.xlu0 %852, %v820
  %v854 = vpop.permute.xlu0 %853
  %855 = vset.pattern.permute.xlu0 0
  %856 = vperm.xlu0 %855, %v821
  %v857 = vpop.permute.xlu0 %856
  %858 = vset.pattern.permute.xlu0 0
  %859 = vperm.xlu0 %858, %v822
  %v860 = vpop.permute.xlu0 %859
  %861 = vset.pattern.permute.xlu0 0
  %862 = vperm.xlu0 %861, %v823
  %v863 = vpop.permute.xlu0 %862
  %864 = vset.pattern.permute.xlu0 0
  %865 = vperm.xlu0 %864, %v824
  %v866 = vpop.permute.xlu0 %865
  %867 = vset.pattern.permute.xlu0 0
  %868 = vperm.xlu0 %867, %v825
  %v869 = vpop.permute.xlu0 %868
  %870 = vset.pattern.permute.xlu0 0
  %871 = vperm.xlu0 %870, %v826
  %v872 = vpop.permute.xlu0 %871
  %873 = vset.pattern.permute.xlu0 0
  %874 = vperm.xlu0 %873, %v827
  %v875 = vpop.permute.xlu0 %874
  %876 = vset.pattern.permute.xlu0 0
  %877 = vperm.xlu0 %876, %v828
  %v878 = vpop.permute.xlu0 %877
  %879 = vset.pattern.permute.xlu0 0
  %880 = vperm.xlu0 %879, %v829
  %v881 = vpop.permute.xlu0 %880
  %882 = vset.pattern.permute.xlu0 0
  %883 = vperm.xlu0 %882, %v830
  %v884 = vpop.permute.xlu0 %883
  %885 = vset.pattern.permute.xlu0 0
  %886 = vperm.xlu0 %885, %v831
  %v887 = vpop.permute.xlu0 %886
  %888 = vset.pattern.permute.xlu0 0
  %889 = vperm.xlu0 %888, %v832
  %v890 = vpop.permute.xlu0 %889
  %891 = vset.pattern.permute.xlu0 0
  %892 = vperm.xlu0 %891, %v833
  %v893 = vpop.permute.xlu0 %892
  %894 = vset.pattern.permute.xlu0 0
  %895 = vperm.xlu0 %894, %v834
  %v896 = vpop.permute.xlu0 %895
  %897 = vset.pattern.permute.xlu0 0
  %898 = vperm.xlu0 %897, %v835
  %v899 = vpop.permute.xlu0 %898
  %900 = vset.pattern.permute.xlu0 0
  %901 = vperm.xlu0 %900, %v836
  %v902 = vpop.permute.xlu0 %901
  %903 = vset.pattern.permute.xlu0 0
  %904 = vperm.xlu0 %903, %v837
  %v905 = vpop.permute.xlu0 %904
  %906 = vset.pattern.permute.xlu0 0
  %907 = vperm.xlu0 %906, %v838
  %v908 = vpop.permute.xlu0 %907
  %909 = vset.pattern.permute.xlu0 0
  %910 = vperm.xlu0 %909, %v839
  %v911 = vpop.permute.xlu0 %910
  %912 = vset.pattern.permute.xlu0 0
  %913 = vperm.xlu0 %912, %v840
  %v914 = vpop.permute.xlu0 %913
  %915 = vset.pattern.permute.xlu0 0
  %916 = vperm.xlu0 %915, %v841
  %v917 = vpop.permute.xlu0 %916
  %918 = vset.pattern.permute.xlu0 0
  %919 = vperm.xlu0 %918, %v842
  %v920 = vpop.permute.xlu0 %919
  %921 = vset.pattern.permute.xlu0 0
  %922 = vperm.xlu0 %921, %v843
  %v923 = vpop.permute.xlu0 %922
  %924 = vset.pattern.permute.xlu0 0
  %925 = vperm.xlu0 %924, %v844
  %v926 = vpop.permute.xlu0 %925
  %927 = vset.pattern.permute.xlu0 0
  %928 = vperm.xlu0 %927, %v845
  %v929 = vpop.permute.xlu0 %928
  %930 = vset.pattern.permute.xlu0 0
  %931 = vperm.xlu0 %930, %v846
  %v932 = vpop.permute.xlu0 %931
  %933 = vset.pattern.permute.xlu0 0
  %934 = vperm.xlu0 %933, %v847
  %v935 = vpop.permute.xlu0 %934
  %936 = vset.pattern.permute.xlu0 0
  %937 = vperm.xlu0 %936, %v848
  %v938 = vpop.permute.xlu0 %937
  %939 = vset.pattern.permute.xlu0 0
  %940 = vperm.xlu0 %939, %v849
  %v941 = vpop.permute.xlu0 %940
  %942 = vset.pattern.permute.xlu0 0
  %943 = vperm.xlu0 %942, %v850
  %v944 = vpop.permute.xlu0 %943
  %945 = vset.pattern.permute.xlu0 0
  %946 = vperm.xlu0 %945, %v851
  %v947 = vpop.permute.xlu0 %946
  %vm948 = vcmp.eq.s32.totalorder %v787, %v854
  %vm949 = vcmp.eq.s32.totalorder %v787, %v857
  %vm950 = vcmp.eq.s32.totalorder %v787, %v860
  %vm951 = vcmp.eq.s32.totalorder %v787, %v863
  %vm952 = vcmp.eq.s32.totalorder %v787, %v866
  %vm953 = vcmp.eq.s32.totalorder %v787, %v869
  %vm954 = vcmp.eq.s32.totalorder %v787, %v872
  %vm955 = vcmp.eq.s32.totalorder %v787, %v875
  %vm956 = vcmp.eq.s32.totalorder %v787, %v878
  %vm957 = vcmp.eq.s32.totalorder %v787, %v881
  %vm958 = vcmp.eq.s32.totalorder %v787, %v884
  %vm959 = vcmp.eq.s32.totalorder %v787, %v887
  %vm960 = vcmp.eq.s32.totalorder %v787, %v890
  %vm961 = vcmp.eq.s32.totalorder %v787, %v893
  %vm962 = vcmp.eq.s32.totalorder %v787, %v896
  %vm963 = vcmp.eq.s32.totalorder %v787, %v899
  %vm964 = vcmp.eq.s32.totalorder %v787, %v902
  %vm965 = vcmp.eq.s32.totalorder %v787, %v905
  %vm966 = vcmp.eq.s32.totalorder %v787, %v908
  %vm967 = vcmp.eq.s32.totalorder %v787, %v911
  %vm968 = vcmp.eq.s32.totalorder %v787, %v914
  %vm969 = vcmp.eq.s32.totalorder %v787, %v917
  %vm970 = vcmp.eq.s32.totalorder %v787, %v920
  %vm971 = vcmp.eq.s32.totalorder %v787, %v923
  %vm972 = vcmp.eq.s32.totalorder %v787, %v926
  %vm973 = vcmp.eq.s32.totalorder %v787, %v929
  %vm974 = vcmp.eq.s32.totalorder %v787, %v932
  %vm975 = vcmp.eq.s32.totalorder %v787, %v935
  %vm976 = vcmp.eq.s32.totalorder %v787, %v938
  %vm977 = vcmp.eq.s32.totalorder %v787, %v941
  %vm978 = vcmp.eq.s32.totalorder %v787, %v944
  %vm979 = vcmp.eq.s32.totalorder %v787, %v947
  %v980 = vsel %vm948, %v657, 0.0
  %v981 = vsel %vm949, %v660, 0.0
  %v982 = vsel %vm950, %v665, 0.0
  %v983 = vsel %vm951, %v668, 0.0
  %v984 = vsel %vm952, %v673, 0.0
  %v985 = vsel %vm953, %v676, 0.0
  %v986 = vsel %vm954, %v681, 0.0
  %v987 = vsel %vm955, %v684, 0.0
  %v988 = vsel %vm956, %v689, 0.0
  %v989 = vsel %vm957, %v692, 0.0
  %v990 = vsel %vm958, %v697, 0.0
  %v991 = vsel %vm959, %v700, 0.0
  %v992 = vsel %vm960, %v705, 0.0
  %v993 = vsel %vm961, %v708, 0.0
  %v994 = vsel %vm962, %v713, 0.0
  %v995 = vsel %vm963, %v716, 0.0
  %v996 = vsel %vm964, %v721, 0.0
  %v997 = vsel %vm965, %v724, 0.0
  %v998 = vsel %vm966, %v729, 0.0
  %v999 = vsel %vm967, %v732, 0.0
  %v1000 = vsel %vm968, %v737, 0.0
  %v1001 = vsel %vm969, %v740, 0.0
  %v1002 = vsel %vm970, %v745, 0.0
  %v1003 = vsel %vm971, %v748, 0.0
  %v1004 = vsel %vm972, %v753, 0.0
  %v1005 = vsel %vm973, %v756, 0.0
  %v1006 = vsel %vm974, %v761, 0.0
  %v1007 = vsel %vm975, %v764, 0.0
  %v1008 = vsel %vm976, %v769, 0.0
  %v1009 = vsel %vm977, %v772, 0.0
  %v1010 = vsel %vm978, %v777, 0.0
  %v1011 = vsel %vm979, %v780, 0.0
  %1012 = vadd.xlane.f32.xlu0 %v980
  %v1013 = vpop.xlane.xlu0 %1012
  %1014 = vadd.xlane.f32.xlu0 %v981
  %v1015 = vpop.xlane.xlu0 %1014
  %1016 = vadd.xlane.f32.xlu0 %v982
  %v1017 = vpop.xlane.xlu0 %1016
  %1018 = vadd.xlane.f32.xlu0 %v983
  %v1019 = vpop.xlane.xlu0 %1018
  %1020 = vadd.xlane.f32.xlu0 %v984
  %v1021 = vpop.xlane.xlu0 %1020
  %1022 = vadd.xlane.f32.xlu0 %v985
  %v1023 = vpop.xlane.xlu0 %1022
  %1024 = vadd.xlane.f32.xlu0 %v986
  %v1025 = vpop.xlane.xlu0 %1024
  %1026 = vadd.xlane.f32.xlu0 %v987
  %v1027 = vpop.xlane.xlu0 %1026
  %1028 = vadd.xlane.f32.xlu0 %v988
  %v1029 = vpop.xlane.xlu0 %1028
  %1030 = vadd.xlane.f32.xlu0 %v989
  %v1031 = vpop.xlane.xlu0 %1030
  %1032 = vadd.xlane.f32.xlu0 %v990
  %v1033 = vpop.xlane.xlu0 %1032
  %1034 = vadd.xlane.f32.xlu0 %v991
  %v1035 = vpop.xlane.xlu0 %1034
  %1036 = vadd.xlane.f32.xlu0 %v992
  %v1037 = vpop.xlane.xlu0 %1036
  %1038 = vadd.xlane.f32.xlu0 %v993
  %v1039 = vpop.xlane.xlu0 %1038
  %1040 = vadd.xlane.f32.xlu0 %v994
  %v1041 = vpop.xlane.xlu0 %1040
  %1042 = vadd.xlane.f32.xlu0 %v995
  %v1043 = vpop.xlane.xlu0 %1042
  %1044 = vadd.xlane.f32.xlu0 %v996
  %v1045 = vpop.xlane.xlu0 %1044
  %1046 = vadd.xlane.f32.xlu0 %v997
  %v1047 = vpop.xlane.xlu0 %1046
  %1048 = vadd.xlane.f32.xlu0 %v998
  %v1049 = vpop.xlane.xlu0 %1048
  %1050 = vadd.xlane.f32.xlu0 %v999
  %v1051 = vpop.xlane.xlu0 %1050
  %1052 = vadd.xlane.f32.xlu0 %v1000
  %v1053 = vpop.xlane.xlu0 %1052
  %1054 = vadd.xlane.f32.xlu0 %v1001
  %v1055 = vpop.xlane.xlu0 %1054
  %1056 = vadd.xlane.f32.xlu0 %v1002
  %v1057 = vpop.xlane.xlu0 %1056
  %1058 = vadd.xlane.f32.xlu0 %v1003
  %v1059 = vpop.xlane.xlu0 %1058
  %1060 = vadd.xlane.f32.xlu0 %v1004
  %v1061 = vpop.xlane.xlu0 %1060
  %1062 = vadd.xlane.f32.xlu0 %v1005
  %v1063 = vpop.xlane.xlu0 %1062
  %1064 = vadd.xlane.f32.xlu0 %v1006
  %v1065 = vpop.xlane.xlu0 %1064
  %1066 = vadd.xlane.f32.xlu0 %v1007
  %v1067 = vpop.xlane.xlu0 %1066
  %1068 = vadd.xlane.f32.xlu0 %v1008
  %v1069 = vpop.xlane.xlu0 %1068
  %1070 = vadd.xlane.f32.xlu0 %v1009
  %v1071 = vpop.xlane.xlu0 %1070
  %1072 = vadd.xlane.f32.xlu0 %v1010
  %v1073 = vpop.xlane.xlu0 %1072
  %1074 = vadd.xlane.f32.xlu0 %v1011
  %v1075 = vpop.xlane.xlu0 %1074
  %v1076 = vadd.f32 %v788, %v1013
  %v1077 = vadd.f32 %v789, %v1015
  %v1078 = vadd.f32 %v790, %v1017
  %v1079 = vadd.f32 %v791, %v1019
  %v1080 = vadd.f32 %v792, %v1021
  %v1081 = vadd.f32 %v793, %v1023
  %v1082 = vadd.f32 %v794, %v1025
  %v1083 = vadd.f32 %v795, %v1027
  %v1084 = vadd.f32 %v796, %v1029
  %v1085 = vadd.f32 %v797, %v1031
  %v1086 = vadd.f32 %v798, %v1033
  %v1087 = vadd.f32 %v799, %v1035
  %v1088 = vadd.f32 %v800, %v1037
  %v1089 = vadd.f32 %v801, %v1039
  %v1090 = vadd.f32 %v802, %v1041
  %v1091 = vadd.f32 %v803, %v1043
  %v1092 = vadd.f32 %v804, %v1045
  %v1093 = vadd.f32 %v805, %v1047
  %v1094 = vadd.f32 %v806, %v1049
  %v1095 = vadd.f32 %v807, %v1051
  %v1096 = vadd.f32 %v808, %v1053
  %v1097 = vadd.f32 %v809, %v1055
  %v1098 = vadd.f32 %v810, %v1057
  %v1099 = vadd.f32 %v811, %v1059
  %v1100 = vadd.f32 %v812, %v1061
  %v1101 = vadd.f32 %v813, %v1063
  %v1102 = vadd.f32 %v814, %v1065
  %v1103 = vadd.f32 %v815, %v1067
  %v1104 = vadd.f32 %v816, %v1069
  %v1105 = vadd.f32 %v817, %v1071
  %v1106 = vadd.f32 %v818, %v1073
  %v1107 = vadd.f32 %v819, %v1075
  %vm1108 = vcmask 7168
  %1109 = vst.msk [vmem:[#allocation5] sm:$0xff] %vm1108, %v1076
  %1110 = vst.msk [vmem:[#allocation5 + $0x8] sm:$0xff] %vm1108, %v1077
  %1111 = vst.msk [vmem:[#allocation5 + $0x10] sm:$0xff] %vm1108, %v1078
  %1112 = vst.msk [vmem:[#allocation5 + $0x18] sm:$0xff] %vm1108, %v1079
  %1113 = vst.msk [vmem:[#allocation5 + $0x20] sm:$0xff] %vm1108, %v1080
  %1114 = vst.msk [vmem:[#allocation5 + $0x28] sm:$0xff] %vm1108, %v1081
  %1115 = vst.msk [vmem:[#allocation5 + $0x30] sm:$0xff] %vm1108, %v1082
  %1116 = vst.msk [vmem:[#allocation5 + $0x38] sm:$0xff] %vm1108, %v1083
  %1117 = vst.msk [vmem:[#allocation5 + $0x40] sm:$0xff] %vm1108, %v1084
  %1118 = vst.msk [vmem:[#allocation5 + $0x48] sm:$0xff] %vm1108, %v1085
  %1119 = vst.msk [vmem:[#allocation5 + $0x50] sm:$0xff] %vm1108, %v1086
  %1120 = vst.msk [vmem:[#allocation5 + $0x58] sm:$0xff] %vm1108, %v1087
  %1121 = vst.msk [vmem:[#allocation5 + $0x60] sm:$0xff] %vm1108, %v1088
  %1122 = vst.msk [vmem:[#allocation5 + $0x68] sm:$0xff] %vm1108, %v1089
  %1123 = vst.msk [vmem:[#allocation5 + $0x70] sm:$0xff] %vm1108, %v1090
  %1124 = vst.msk [vmem:[#allocation5 + $0x78] sm:$0xff] %vm1108, %v1091
  %1125 = vst.msk [vmem:[#allocation5 + $0x80] sm:$0xff] %vm1108, %v1092
  %1126 = vst.msk [vmem:[#allocation5 + $0x88] sm:$0xff] %vm1108, %v1093
  %1127 = vst.msk [vmem:[#allocation5 + $0x90] sm:$0xff] %vm1108, %v1094
  %1128 = vst.msk [vmem:[#allocation5 + $0x98] sm:$0xff] %vm1108, %v1095
  %1129 = vst.msk [vmem:[#allocation5 + $0xa0] sm:$0xff] %vm1108, %v1096
  %1130 = vst.msk [vmem:[#allocation5 + $0xa8] sm:$0xff] %vm1108, %v1097
  %1131 = vst.msk [vmem:[#allocation5 + $0xb0] sm:$0xff] %vm1108, %v1098
  %1132 = vst.msk [vmem:[#allocation5 + $0xb8] sm:$0xff] %vm1108, %v1099
  %1133 = vst.msk [vmem:[#allocation5 + $0xc0] sm:$0xff] %vm1108, %v1100
  %1134 = vst.msk [vmem:[#allocation5 + $0xc8] sm:$0xff] %vm1108, %v1101
  %1135 = vst.msk [vmem:[#allocation5 + $0xd0] sm:$0xff] %vm1108, %v1102
  %1136 = vst.msk [vmem:[#allocation5 + $0xd8] sm:$0xff] %vm1108, %v1103
  %1137 = vst.msk [vmem:[#allocation5 + $0xe0] sm:$0xff] %vm1108, %v1104
  %1138 = vst.msk [vmem:[#allocation5 + $0xe8] sm:$0xff] %vm1108, %v1105
  %1139 = vst.msk [vmem:[#allocation5 + $0xf0] sm:$0xff] %vm1108, %v1106
  %1140 = vst.msk [vmem:[#allocation5 + $0xf8] sm:$0xff] %vm1108, %v1107
  %v1141 = vld [vmem:[#allocation3] sm:$0xff]
  %v1142 = vld [vmem:[#allocation3 + $0x8] sm:$0xff]
  %v1143 = vld [vmem:[#allocation3 + $0x10] sm:$0xff]
  %v1144 = vld [vmem:[#allocation3 + $0x18] sm:$0xff]
  %v1145 = vld [vmem:[#allocation3 + $0x20] sm:$0xff]
  %v1146 = vld [vmem:[#allocation3 + $0x28] sm:$0xff]
  %v1147 = vld [vmem:[#allocation3 + $0x30] sm:$0xff]
  %v1148 = vld [vmem:[#allocation3 + $0x38] sm:$0xff]
  %v1149 = vld [vmem:[#allocation3 + $0x40] sm:$0xff]
  %v1150 = vld [vmem:[#allocation3 + $0x48] sm:$0xff]
  %v1151 = vld [vmem:[#allocation3 + $0x50] sm:$0xff]
  %v1152 = vld [vmem:[#allocation3 + $0x58] sm:$0xff]
  %v1153 = vld [vmem:[#allocation3 + $0x60] sm:$0xff]
  %v1154 = vld [vmem:[#allocation3 + $0x68] sm:$0xff]
  %v1155 = vld [vmem:[#allocation3 + $0x70] sm:$0xff]
  %v1156 = vld [vmem:[#allocation3 + $0x78] sm:$0xff]
  %v1157 = vld [vmem:[#allocation3 + $0x80] sm:$0xff]
  %v1158 = vld [vmem:[#allocation3 + $0x88] sm:$0xff]
  %v1159 = vld [vmem:[#allocation3 + $0x90] sm:$0xff]
  %v1160 = vld [vmem:[#allocation3 + $0x98] sm:$0xff]
  %v1161 = vld [vmem:[#allocation3 + $0xa0] sm:$0xff]
  %v1162 = vld [vmem:[#allocation3 + $0xa8] sm:$0xff]
  %v1163 = vld [vmem:[#allocation3 + $0xb0] sm:$0xff]
  %v1164 = vld [vmem:[#allocation3 + $0xb8] sm:$0xff]
  %v1165 = vld [vmem:[#allocation3 + $0xc0] sm:$0xff]
  %v1166 = vld [vmem:[#allocation3 + $0xc8] sm:$0xff]
  %v1167 = vld [vmem:[#allocation3 + $0xd0] sm:$0xff]
  %v1168 = vld [vmem:[#allocation3 + $0xd8] sm:$0xff]
  %v1169 = vld [vmem:[#allocation3 + $0xe0] sm:$0xff]
  %v1170 = vld [vmem:[#allocation3 + $0xe8] sm:$0xff]
  %v1171 = vld [vmem:[#allocation3 + $0xf0] sm:$0xff]
  %v1172 = vld [vmem:[#allocation3 + $0xf8] sm:$0xff]
  %1173 = vmax.xlane.f32.xlu0 %v657
  %v1174 = vpop.xlane.xlu0 %1173
  %1175 = vmax.xlane.f32.xlu0 %v660
  %v1176 = vpop.xlane.xlu0 %1175
  %1177 = vmax.xlane.f32.xlu0 %v665
  %v1178 = vpop.xlane.xlu0 %1177
  %1179 = vmax.xlane.f32.xlu0 %v668
  %v1180 = vpop.xlane.xlu0 %1179
  %1181 = vmax.xlane.f32.xlu0 %v673
  %v1182 = vpop.xlane.xlu0 %1181
  %1183 = vmax.xlane.f32.xlu0 %v676
  %v1184 = vpop.xlane.xlu0 %1183
  %1185 = vmax.xlane.f32.xlu0 %v681
  %v1186 = vpop.xlane.xlu0 %1185
  %1187 = vmax.xlane.f32.xlu0 %v684
  %v1188 = vpop.xlane.xlu0 %1187
  %1189 = vmax.xlane.f32.xlu0 %v689
  %v1190 = vpop.xlane.xlu0 %1189
  %1191 = vmax.xlane.f32.xlu0 %v692
  %v1192 = vpop.xlane.xlu0 %1191
  %1193 = vmax.xlane.f32.xlu0 %v697
  %v1194 = vpop.xlane.xlu0 %1193
  %1195 = vmax.xlane.f32.xlu0 %v700
  %v1196 = vpop.xlane.xlu0 %1195
  %1197 = vmax.xlane.f32.xlu0 %v705
  %v1198 = vpop.xlane.xlu0 %1197
  %1199 = vmax.xlane.f32.xlu0 %v708
  %v1200 = vpop.xlane.xlu0 %1199
  %1201 = vmax.xlane.f32.xlu0 %v713
  %v1202 = vpop.xlane.xlu0 %1201
  %1203 = vmax.xlane.f32.xlu0 %v716
  %v1204 = vpop.xlane.xlu0 %1203
  %1205 = vmax.xlane.f32.xlu0 %v721
  %v1206 = vpop.xlane.xlu0 %1205
  %1207 = vmax.xlane.f32.xlu0 %v724
  %v1208 = vpop.xlane.xlu0 %1207
  %1209 = vmax.xlane.f32.xlu0 %v729
  %v1210 = vpop.xlane.xlu0 %1209
  %1211 = vmax.xlane.f32.xlu0 %v732
  %v1212 = vpop.xlane.xlu0 %1211
  %1213 = vmax.xlane.f32.xlu0 %v737
  %v1214 = vpop.xlane.xlu0 %1213
  %1215 = vmax.xlane.f32.xlu0 %v740
  %v1216 = vpop.xlane.xlu0 %1215
  %1217 = vmax.xlane.f32.xlu0 %v745
  %v1218 = vpop.xlane.xlu0 %1217
  %1219 = vmax.xlane.f32.xlu0 %v748
  %v1220 = vpop.xlane.xlu0 %1219
  %1221 = vmax.xlane.f32.xlu0 %v753
  %v1222 = vpop.xlane.xlu0 %1221
  %1223 = vmax.xlane.f32.xlu0 %v756
  %v1224 = vpop.xlane.xlu0 %1223
  %1225 = vmax.xlane.f32.xlu0 %v761
  %v1226 = vpop.xlane.xlu0 %1225
  %1227 = vmax.xlane.f32.xlu0 %v764
  %v1228 = vpop.xlane.xlu0 %1227
  %1229 = vmax.xlane.f32.xlu0 %v769
  %v1230 = vpop.xlane.xlu0 %1229
  %1231 = vmax.xlane.f32.xlu0 %v772
  %v1232 = vpop.xlane.xlu0 %1231
  %1233 = vmax.xlane.f32.xlu0 %v777
  %v1234 = vpop.xlane.xlu0 %1233
  %1235 = vmax.xlane.f32.xlu0 %v780
  %v1236 = vpop.xlane.xlu0 %1235
  %v1237 = vmax.f32 %v1141, %v1174
  %v1238 = vmax.f32 %v1142, %v1176
  %v1239 = vmax.f32 %v1143, %v1178
  %v1240 = vmax.f32 %v1144, %v1180
  %v1241 = vmax.f32 %v1145, %v1182
  %v1242 = vmax.f32 %v1146, %v1184
  %v1243 = vmax.f32 %v1147, %v1186
  %v1244 = vmax.f32 %v1148, %v1188
  %v1245 = vmax.f32 %v1149, %v1190
  %v1246 = vmax.f32 %v1150, %v1192
  %v1247 = vmax.f32 %v1151, %v1194
  %v1248 = vmax.f32 %v1152, %v1196
  %v1249 = vmax.f32 %v1153, %v1198
  %v1250 = vmax.f32 %v1154, %v1200
  %v1251 = vmax.f32 %v1155, %v1202
  %v1252 = vmax.f32 %v1156, %v1204
  %v1253 = vmax.f32 %v1157, %v1206
  %v1254 = vmax.f32 %v1158, %v1208
  %v1255 = vmax.f32 %v1159, %v1210
  %v1256 = vmax.f32 %v1160, %v1212
  %v1257 = vmax.f32 %v1161, %v1214
  %v1258 = vmax.f32 %v1162, %v1216
  %v1259 = vmax.f32 %v1163, %v1218
  %v1260 = vmax.f32 %v1164, %v1220
  %v1261 = vmax.f32 %v1165, %v1222
  %v1262 = vmax.f32 %v1166, %v1224
  %v1263 = vmax.f32 %v1167, %v1226
  %v1264 = vmax.f32 %v1168, %v1228
  %v1265 = vmax.f32 %v1169, %v1230
  %v1266 = vmax.f32 %v1170, %v1232
  %v1267 = vmax.f32 %v1171, %v1234
  %v1268 = vmax.f32 %v1172, %v1236
  %v1269 = vld [vmem:[#allocation4] sm:$0xff]
  %v1270 = vld [vmem:[#allocation4 + $0x8] sm:$0xff]
  %v1271 = vld [vmem:[#allocation4 + $0x10] sm:$0xff]
  %v1272 = vld [vmem:[#allocation4 + $0x18] sm:$0xff]
  %v1273 = vld [vmem:[#allocation4 + $0x20] sm:$0xff]
  %v1274 = vld [vmem:[#allocation4 + $0x28] sm:$0xff]
  %v1275 = vld [vmem:[#allocation4 + $0x30] sm:$0xff]
  %v1276 = vld [vmem:[#allocation4 + $0x38] sm:$0xff]
  %v1277 = vld [vmem:[#allocation4 + $0x40] sm:$0xff]
  %v1278 = vld [vmem:[#allocation4 + $0x48] sm:$0xff]
  %v1279 = vld [vmem:[#allocation4 + $0x50] sm:$0xff]
  %v1280 = vld [vmem:[#allocation4 + $0x58] sm:$0xff]
  %v1281 = vld [vmem:[#allocation4 + $0x60] sm:$0xff]
  %v1282 = vld [vmem:[#allocation4 + $0x68] sm:$0xff]
  %v1283 = vld [vmem:[#allocation4 + $0x70] sm:$0xff]
  %v1284 = vld [vmem:[#allocation4 + $0x78] sm:$0xff]
  %v1285 = vld [vmem:[#allocation4 + $0x80] sm:$0xff]
  %v1286 = vld [vmem:[#allocation4 + $0x88] sm:$0xff]
  %v1287 = vld [vmem:[#allocation4 + $0x90] sm:$0xff]
  %v1288 = vld [vmem:[#allocation4 + $0x98] sm:$0xff]
  %v1289 = vld [vmem:[#allocation4 + $0xa0] sm:$0xff]
  %v1290 = vld [vmem:[#allocation4 + $0xa8] sm:$0xff]
  %v1291 = vld [vmem:[#allocation4 + $0xb0] sm:$0xff]
  %v1292 = vld [vmem:[#allocation4 + $0xb8] sm:$0xff]
  %v1293 = vld [vmem:[#allocation4 + $0xc0] sm:$0xff]
  %v1294 = vld [vmem:[#allocation4 + $0xc8] sm:$0xff]
  %v1295 = vld [vmem:[#allocation4 + $0xd0] sm:$0xff]
  %v1296 = vld [vmem:[#allocation4 + $0xd8] sm:$0xff]
  %v1297 = vld [vmem:[#allocation4 + $0xe0] sm:$0xff]
  %v1298 = vld [vmem:[#allocation4 + $0xe8] sm:$0xff]
  %v1299 = vld [vmem:[#allocation4 + $0xf0] sm:$0xff]
  %v1300 = vld [vmem:[#allocation4 + $0xf8] sm:$0xff]
  %v1301 = vsub.f32 %v1141, %v1237
  %v1302 = vsub.f32 %v1142, %v1238
  %v1303 = vsub.f32 %v1143, %v1239
  %v1304 = vsub.f32 %v1144, %v1240
  %v1305 = vsub.f32 %v1145, %v1241
  %v1306 = vsub.f32 %v1146, %v1242
  %v1307 = vsub.f32 %v1147, %v1243
  %v1308 = vsub.f32 %v1148, %v1244
  %v1309 = vsub.f32 %v1149, %v1245
  %v1310 = vsub.f32 %v1150, %v1246
  %v1311 = vsub.f32 %v1151, %v1247
  %v1312 = vsub.f32 %v1152, %v1248
  %v1313 = vsub.f32 %v1153, %v1249
  %v1314 = vsub.f32 %v1154, %v1250
  %v1315 = vsub.f32 %v1155, %v1251
  %v1316 = vsub.f32 %v1156, %v1252
  %v1317 = vsub.f32 %v1157, %v1253
  %v1318 = vsub.f32 %v1158, %v1254
  %v1319 = vsub.f32 %v1159, %v1255
  %v1320 = vsub.f32 %v1160, %v1256
  %v1321 = vsub.f32 %v1161, %v1257
  %v1322 = vsub.f32 %v1162, %v1258
  %v1323 = vsub.f32 %v1163, %v1259
  %v1324 = vsub.f32 %v1164, %v1260
  %v1325 = vsub.f32 %v1165, %v1261
  %v1326 = vsub.f32 %v1166, %v1262
  %v1327 = vsub.f32 %v1167, %v1263
  %v1328 = vsub.f32 %v1168, %v1264
  %v1329 = vsub.f32 %v1169, %v1265
  %v1330 = vsub.f32 %v1170, %v1266
  %v1331 = vsub.f32 %v1171, %v1267
  %v1332 = vsub.f32 %v1172, %v1268
  %v1333 = vmul.f32 %v1301, 1.442695
  %v1334 = vpow.pop %v1333
  %v1335 = vmul.f32 %v1302, 1.442695
  %v1336 = vpow.pop %v1335
  %v1337 = vmul.f32 %v1303, 1.442695
  %v1338 = vpow.pop %v1337
  %v1339 = vmul.f32 %v1304, 1.442695
  %v1340 = vpow.pop %v1339
  %v1341 = vmul.f32 %v1305, 1.442695
  %v1342 = vpow.pop %v1341
  %v1343 = vmul.f32 %v1306, 1.442695
  %v1344 = vpow.pop %v1343
  %v1345 = vmul.f32 %v1307, 1.442695
  %v1346 = vpow.pop %v1345
  %v1347 = vmul.f32 %v1308, 1.442695
  %v1348 = vpow.pop %v1347
  %v1349 = vmul.f32 %v1309, 1.442695
  %v1350 = vpow.pop %v1349
  %v1351 = vmul.f32 %v1310, 1.442695
  %v1352 = vpow.pop %v1351
  %v1353 = vmul.f32 %v1311, 1.442695
  %v1354 = vpow.pop %v1353
  %v1355 = vmul.f32 %v1312, 1.442695
  %v1356 = vpow.pop %v1355
  %v1357 = vmul.f32 %v1313, 1.442695
  %v1358 = vpow.pop %v1357
  %v1359 = vmul.f32 %v1314, 1.442695
  %v1360 = vpow.pop %v1359
  %v1361 = vmul.f32 %v1315, 1.442695
  %v1362 = vpow.pop %v1361
  %v1363 = vmul.f32 %v1316, 1.442695
  %v1364 = vpow.pop %v1363
  %v1365 = vmul.f32 %v1317, 1.442695
  %v1366 = vpow.pop %v1365
  %v1367 = vmul.f32 %v1318, 1.442695
  %v1368 = vpow.pop %v1367
  %v1369 = vmul.f32 %v1319, 1.442695
  %v1370 = vpow.pop %v1369
  %v1371 = vmul.f32 %v1320, 1.442695
  %v1372 = vpow.pop %v1371
  %v1373 = vmul.f32 %v1321, 1.442695
  %v1374 = vpow.pop %v1373
  %v1375 = vmul.f32 %v1322, 1.442695
  %v1376 = vpow.pop %v1375
  %v1377 = vmul.f32 %v1323, 1.442695
  %v1378 = vpow.pop %v1377
  %v1379 = vmul.f32 %v1324, 1.442695
  %v1380 = vpow.pop %v1379
  %v1381 = vmul.f32 %v1325, 1.442695
  %v1382 = vpow.pop %v1381
  %v1383 = vmul.f32 %v1326, 1.442695
  %v1384 = vpow.pop %v1383
  %v1385 = vmul.f32 %v1327, 1.442695
  %v1386 = vpow.pop %v1385
  %v1387 = vmul.f32 %v1328, 1.442695
  %v1388 = vpow.pop %v1387
  %v1389 = vmul.f32 %v1329, 1.442695
  %v1390 = vpow.pop %v1389
  %v1391 = vmul.f32 %v1330, 1.442695
  %v1392 = vpow.pop %v1391
  %v1393 = vmul.f32 %v1331, 1.442695
  %v1394 = vpow.pop %v1393
  %v1395 = vmul.f32 %v1332, 1.442695
  %v1396 = vpow.pop %v1395
  %v1397 = vmul.f32 %v1269, %v1334
  %v1398 = vmul.f32 %v1270, %v1336
  %v1399 = vmul.f32 %v1271, %v1338
  %v1400 = vmul.f32 %v1272, %v1340
  %v1401 = vmul.f32 %v1273, %v1342
  %v1402 = vmul.f32 %v1274, %v1344
  %v1403 = vmul.f32 %v1275, %v1346
  %v1404 = vmul.f32 %v1276, %v1348
  %v1405 = vmul.f32 %v1277, %v1350
  %v1406 = vmul.f32 %v1278, %v1352
  %v1407 = vmul.f32 %v1279, %v1354
  %v1408 = vmul.f32 %v1280, %v1356
  %v1409 = vmul.f32 %v1281, %v1358
  %v1410 = vmul.f32 %v1282, %v1360
  %v1411 = vmul.f32 %v1283, %v1362
  %v1412 = vmul.f32 %v1284, %v1364
  %v1413 = vmul.f32 %v1285, %v1366
  %v1414 = vmul.f32 %v1286, %v1368
  %v1415 = vmul.f32 %v1287, %v1370
  %v1416 = vmul.f32 %v1288, %v1372
  %v1417 = vmul.f32 %v1289, %v1374
  %v1418 = vmul.f32 %v1290, %v1376
  %v1419 = vmul.f32 %v1291, %v1378
  %v1420 = vmul.f32 %v1292, %v1380
  %v1421 = vmul.f32 %v1293, %v1382
  %v1422 = vmul.f32 %v1294, %v1384
  %v1423 = vmul.f32 %v1295, %v1386
  %v1424 = vmul.f32 %v1296, %v1388
  %v1425 = vmul.f32 %v1297, %v1390
  %v1426 = vmul.f32 %v1298, %v1392
  %v1427 = vmul.f32 %v1299, %v1394
  %v1428 = vmul.f32 %v1300, %v1396
  %1430 = vset.pattern.permute.xlu0 0
  %1431 = vperm.xlu0 %1430, %v1237
  %v1432 = vpop.permute.xlu0 %1431
  %1435 = vset.pattern.permute.xlu0 0
  %1436 = vperm.xlu0 %1435, %v1238
  %v1437 = vpop.permute.xlu0 %1436
  %1440 = vset.pattern.permute.xlu0 0
  %1441 = vperm.xlu0 %1440, %v1239
  %v1442 = vpop.permute.xlu0 %1441
  %1445 = vset.pattern.permute.xlu0 0
  %1446 = vperm.xlu0 %1445, %v1240
  %v1447 = vpop.permute.xlu0 %1446
  %1450 = vset.pattern.permute.xlu0 0
  %1451 = vperm.xlu0 %1450, %v1241
  %v1452 = vpop.permute.xlu0 %1451
  %1455 = vset.pattern.permute.xlu0 0
  %1456 = vperm.xlu0 %1455, %v1242
  %v1457 = vpop.permute.xlu0 %1456
  %1460 = vset.pattern.permute.xlu0 0
  %1461 = vperm.xlu0 %1460, %v1243
  %v1462 = vpop.permute.xlu0 %1461
  %1465 = vset.pattern.permute.xlu0 0
  %1466 = vperm.xlu0 %1465, %v1244
  %v1467 = vpop.permute.xlu0 %1466
  %1470 = vset.pattern.permute.xlu0 0
  %1471 = vperm.xlu0 %1470, %v1245
  %v1472 = vpop.permute.xlu0 %1471
  %1475 = vset.pattern.permute.xlu0 0
  %1476 = vperm.xlu0 %1475, %v1246
  %v1477 = vpop.permute.xlu0 %1476
  %1480 = vset.pattern.permute.xlu0 0
  %1481 = vperm.xlu0 %1480, %v1247
  %v1482 = vpop.permute.xlu0 %1481
  %1485 = vset.pattern.permute.xlu0 0
  %1486 = vperm.xlu0 %1485, %v1248
  %v1487 = vpop.permute.xlu0 %1486
  %1490 = vset.pattern.permute.xlu0 0
  %1491 = vperm.xlu0 %1490, %v1249
  %v1492 = vpop.permute.xlu0 %1491
  %1495 = vset.pattern.permute.xlu0 0
  %1496 = vperm.xlu0 %1495, %v1250
  %v1497 = vpop.permute.xlu0 %1496
  %1500 = vset.pattern.permute.xlu0 0
  %1501 = vperm.xlu0 %1500, %v1251
  %v1502 = vpop.permute.xlu0 %1501
  %1505 = vset.pattern.permute.xlu0 0
  %1506 = vperm.xlu0 %1505, %v1252
  %v1507 = vpop.permute.xlu0 %1506
  %1510 = vset.pattern.permute.xlu0 0
  %1511 = vperm.xlu0 %1510, %v1253
  %v1512 = vpop.permute.xlu0 %1511
  %1515 = vset.pattern.permute.xlu0 0
  %1516 = vperm.xlu0 %1515, %v1254
  %v1517 = vpop.permute.xlu0 %1516
  %1520 = vset.pattern.permute.xlu0 0
  %1521 = vperm.xlu0 %1520, %v1255
  %v1522 = vpop.permute.xlu0 %1521
  %1525 = vset.pattern.permute.xlu0 0
  %1526 = vperm.xlu0 %1525, %v1256
  %v1527 = vpop.permute.xlu0 %1526
  %1530 = vset.pattern.permute.xlu0 0
  %1531 = vperm.xlu0 %1530, %v1257
  %v1532 = vpop.permute.xlu0 %1531
  %1535 = vset.pattern.permute.xlu0 0
  %1536 = vperm.xlu0 %1535, %v1258
  %v1537 = vpop.permute.xlu0 %1536
  %1540 = vset.pattern.permute.xlu0 0
  %1541 = vperm.xlu0 %1540, %v1259
  %v1542 = vpop.permute.xlu0 %1541
  %1545 = vset.pattern.permute.xlu0 0
  %1546 = vperm.xlu0 %1545, %v1260
  %v1547 = vpop.permute.xlu0 %1546
  %1550 = vset.pattern.permute.xlu0 0
  %1551 = vperm.xlu0 %1550, %v1261
  %v1552 = vpop.permute.xlu0 %1551
  %1555 = vset.pattern.permute.xlu0 0
  %1556 = vperm.xlu0 %1555, %v1262
  %v1557 = vpop.permute.xlu0 %1556
  %1560 = vset.pattern.permute.xlu0 0
  %1561 = vperm.xlu0 %1560, %v1263
  %v1562 = vpop.permute.xlu0 %1561
  %1565 = vset.pattern.permute.xlu0 0
  %1566 = vperm.xlu0 %1565, %v1264
  %v1567 = vpop.permute.xlu0 %1566
  %1570 = vset.pattern.permute.xlu0 0
  %1571 = vperm.xlu0 %1570, %v1265
  %v1572 = vpop.permute.xlu0 %1571
  %1575 = vset.pattern.permute.xlu0 0
  %1576 = vperm.xlu0 %1575, %v1266
  %v1577 = vpop.permute.xlu0 %1576
  %1580 = vset.pattern.permute.xlu0 0
  %1581 = vperm.xlu0 %1580, %v1267
  %v1582 = vpop.permute.xlu0 %1581
  %1585 = vset.pattern.permute.xlu0 0
  %1586 = vperm.xlu0 %1585, %v1268
  %v1587 = vpop.permute.xlu0 %1586
  %v1589 = vsub.f32 %v657, %v1432
  %v1590 = vsub.f32 %v660, %v1437
  %v1591 = vsub.f32 %v665, %v1442
  %v1592 = vsub.f32 %v668, %v1447
  %v1593 = vsub.f32 %v673, %v1452
  %v1594 = vsub.f32 %v676, %v1457
  %v1595 = vsub.f32 %v681, %v1462
  %v1596 = vsub.f32 %v684, %v1467
  %v1597 = vsub.f32 %v689, %v1472
  %v1598 = vsub.f32 %v692, %v1477
  %v1599 = vsub.f32 %v697, %v1482
  %v1600 = vsub.f32 %v700, %v1487
  %v1601 = vsub.f32 %v705, %v1492
  %v1602 = vsub.f32 %v708, %v1497
  %v1603 = vsub.f32 %v713, %v1502
  %v1604 = vsub.f32 %v716, %v1507
  %v1605 = vsub.f32 %v721, %v1512
  %v1606 = vsub.f32 %v724, %v1517
  %v1607 = vsub.f32 %v729, %v1522
  %v1608 = vsub.f32 %v732, %v1527
  %v1609 = vsub.f32 %v737, %v1532
  %v1610 = vsub.f32 %v740, %v1537
  %v1611 = vsub.f32 %v745, %v1542
  %v1612 = vsub.f32 %v748, %v1547
  %v1613 = vsub.f32 %v753, %v1552
  %v1614 = vsub.f32 %v756, %v1557
  %v1615 = vsub.f32 %v761, %v1562
  %v1616 = vsub.f32 %v764, %v1567
  %v1617 = vsub.f32 %v769, %v1572
  %v1618 = vsub.f32 %v772, %v1577
  %v1619 = vsub.f32 %v777, %v1582
  %v1620 = vsub.f32 %v780, %v1587
  %v1621 = vmul.f32 %v1589, 1.442695
  %v1622 = vpow.pop %v1621
  %v1623 = vmul.f32 %v1590, 1.442695
  %v1624 = vpow.pop %v1623
  %v1625 = vmul.f32 %v1591, 1.442695
  %v1626 = vpow.pop %v1625
  %v1627 = vmul.f32 %v1592, 1.442695
  %v1628 = vpow.pop %v1627
  %v1629 = vmul.f32 %v1593, 1.442695
  %v1630 = vpow.pop %v1629
  %v1631 = vmul.f32 %v1594, 1.442695
  %v1632 = vpow.pop %v1631
  %v1633 = vmul.f32 %v1595, 1.442695
  %v1634 = vpow.pop %v1633
  %v1635 = vmul.f32 %v1596, 1.442695
  %v1636 = vpow.pop %v1635
  %v1637 = vmul.f32 %v1597, 1.442695
  %v1638 = vpow.pop %v1637
  %v1639 = vmul.f32 %v1598, 1.442695
  %v1640 = vpow.pop %v1639
  %v1641 = vmul.f32 %v1599, 1.442695
  %v1642 = vpow.pop %v1641
  %v1643 = vmul.f32 %v1600, 1.442695
  %v1644 = vpow.pop %v1643
  %v1645 = vmul.f32 %v1601, 1.442695
  %v1646 = vpow.pop %v1645
  %v1647 = vmul.f32 %v1602, 1.442695
  %v1648 = vpow.pop %v1647
  %v1649 = vmul.f32 %v1603, 1.442695
  %v1650 = vpow.pop %v1649
  %v1651 = vmul.f32 %v1604, 1.442695
  %v1652 = vpow.pop %v1651
  %v1653 = vmul.f32 %v1605, 1.442695
  %v1654 = vpow.pop %v1653
  %v1655 = vmul.f32 %v1606, 1.442695
  %v1656 = vpow.pop %v1655
  %v1657 = vmul.f32 %v1607, 1.442695
  %v1658 = vpow.pop %v1657
  %v1659 = vmul.f32 %v1608, 1.442695
  %v1660 = vpow.pop %v1659
  %v1661 = vmul.f32 %v1609, 1.442695
  %v1662 = vpow.pop %v1661
  %v1663 = vmul.f32 %v1610, 1.442695
  %v1664 = vpow.pop %v1663
  %v1665 = vmul.f32 %v1611, 1.442695
  %v1666 = vpow.pop %v1665
  %v1667 = vmul.f32 %v1612, 1.442695
  %v1668 = vpow.pop %v1667
  %v1669 = vmul.f32 %v1613, 1.442695
  %v1670 = vpow.pop %v1669
  %v1671 = vmul.f32 %v1614, 1.442695
  %v1672 = vpow.pop %v1671
  %v1673 = vmul.f32 %v1615, 1.442695
  %v1674 = vpow.pop %v1673
  %v1675 = vmul.f32 %v1616, 1.442695
  %v1676 = vpow.pop %v1675
  %v1677 = vmul.f32 %v1617, 1.442695
  %v1678 = vpow.pop %v1677
  %v1679 = vmul.f32 %v1618, 1.442695
  %v1680 = vpow.pop %v1679
  %v1681 = vmul.f32 %v1619, 1.442695
  %v1682 = vpow.pop %v1681
  %v1683 = vmul.f32 %v1620, 1.442695
  %v1684 = vpow.pop %v1683
  %1685 = vadd.xlane.f32.xlu0 %v1622
  %v1686 = vpop.xlane.xlu0 %1685
  %1687 = vadd.xlane.f32.xlu0 %v1624
  %v1688 = vpop.xlane.xlu0 %1687
  %1689 = vadd.xlane.f32.xlu0 %v1626
  %v1690 = vpop.xlane.xlu0 %1689
  %1691 = vadd.xlane.f32.xlu0 %v1628
  %v1692 = vpop.xlane.xlu0 %1691
  %1693 = vadd.xlane.f32.xlu0 %v1630
  %v1694 = vpop.xlane.xlu0 %1693
  %1695 = vadd.xlane.f32.xlu0 %v1632
  %v1696 = vpop.xlane.xlu0 %1695
  %1697 = vadd.xlane.f32.xlu0 %v1634
  %v1698 = vpop.xlane.xlu0 %1697
  %1699 = vadd.xlane.f32.xlu0 %v1636
  %v1700 = vpop.xlane.xlu0 %1699
  %1701 = vadd.xlane.f32.xlu0 %v1638
  %v1702 = vpop.xlane.xlu0 %1701
  %1703 = vadd.xlane.f32.xlu0 %v1640
  %v1704 = vpop.xlane.xlu0 %1703
  %1705 = vadd.xlane.f32.xlu0 %v1642
  %v1706 = vpop.xlane.xlu0 %1705
  %1707 = vadd.xlane.f32.xlu0 %v1644
  %v1708 = vpop.xlane.xlu0 %1707
  %1709 = vadd.xlane.f32.xlu0 %v1646
  %v1710 = vpop.xlane.xlu0 %1709
  %1711 = vadd.xlane.f32.xlu0 %v1648
  %v1712 = vpop.xlane.xlu0 %1711
  %1713 = vadd.xlane.f32.xlu0 %v1650
  %v1714 = vpop.xlane.xlu0 %1713
  %1715 = vadd.xlane.f32.xlu0 %v1652
  %v1716 = vpop.xlane.xlu0 %1715
  %1717 = vadd.xlane.f32.xlu0 %v1654
  %v1718 = vpop.xlane.xlu0 %1717
  %1719 = vadd.xlane.f32.xlu0 %v1656
  %v1720 = vpop.xlane.xlu0 %1719
  %1721 = vadd.xlane.f32.xlu0 %v1658
  %v1722 = vpop.xlane.xlu0 %1721
  %1723 = vadd.xlane.f32.xlu0 %v1660
  %v1724 = vpop.xlane.xlu0 %1723
  %1725 = vadd.xlane.f32.xlu0 %v1662
  %v1726 = vpop.xlane.xlu0 %1725
  %1727 = vadd.xlane.f32.xlu0 %v1664
  %v1728 = vpop.xlane.xlu0 %1727
  %1729 = vadd.xlane.f32.xlu0 %v1666
  %v1730 = vpop.xlane.xlu0 %1729
  %1731 = vadd.xlane.f32.xlu0 %v1668
  %v1732 = vpop.xlane.xlu0 %1731
  %1733 = vadd.xlane.f32.xlu0 %v1670
  %v1734 = vpop.xlane.xlu0 %1733
  %1735 = vadd.xlane.f32.xlu0 %v1672
  %v1736 = vpop.xlane.xlu0 %1735
  %1737 = vadd.xlane.f32.xlu0 %v1674
  %v1738 = vpop.xlane.xlu0 %1737
  %1739 = vadd.xlane.f32.xlu0 %v1676
  %v1740 = vpop.xlane.xlu0 %1739
  %1741 = vadd.xlane.f32.xlu0 %v1678
  %v1742 = vpop.xlane.xlu0 %1741
  %1743 = vadd.xlane.f32.xlu0 %v1680
  %v1744 = vpop.xlane.xlu0 %1743
  %1745 = vadd.xlane.f32.xlu0 %v1682
  %v1746 = vpop.xlane.xlu0 %1745
  %1747 = vadd.xlane.f32.xlu0 %v1684
  %v1748 = vpop.xlane.xlu0 %1747
  %v1749 = vadd.f32 %v1397, %v1686
  %v1750 = vadd.f32 %v1398, %v1688
  %v1751 = vadd.f32 %v1399, %v1690
  %v1752 = vadd.f32 %v1400, %v1692
  %v1753 = vadd.f32 %v1401, %v1694
  %v1754 = vadd.f32 %v1402, %v1696
  %v1755 = vadd.f32 %v1403, %v1698
  %v1756 = vadd.f32 %v1404, %v1700
  %v1757 = vadd.f32 %v1405, %v1702
  %v1758 = vadd.f32 %v1406, %v1704
  %v1759 = vadd.f32 %v1407, %v1706
  %v1760 = vadd.f32 %v1408, %v1708
  %v1761 = vadd.f32 %v1409, %v1710
  %v1762 = vadd.f32 %v1410, %v1712
  %v1763 = vadd.f32 %v1411, %v1714
  %v1764 = vadd.f32 %v1412, %v1716
  %v1765 = vadd.f32 %v1413, %v1718
  %v1766 = vadd.f32 %v1414, %v1720
  %v1767 = vadd.f32 %v1415, %v1722
  %v1768 = vadd.f32 %v1416, %v1724
  %v1769 = vadd.f32 %v1417, %v1726
  %v1770 = vadd.f32 %v1418, %v1728
  %v1771 = vadd.f32 %v1419, %v1730
  %v1772 = vadd.f32 %v1420, %v1732
  %v1773 = vadd.f32 %v1421, %v1734
  %v1774 = vadd.f32 %v1422, %v1736
  %v1775 = vadd.f32 %v1423, %v1738
  %v1776 = vadd.f32 %v1424, %v1740
  %v1777 = vadd.f32 %v1425, %v1742
  %v1778 = vadd.f32 %v1426, %v1744
  %v1779 = vadd.f32 %v1427, %v1746
  %v1780 = vadd.f32 %v1428, %v1748
  %1781 = vst.msk [vmem:[#allocation4] sm:$0xff] %vm1108, %v1749
  %1782 = vst.msk [vmem:[#allocation4 + $0x8] sm:$0xff] %vm1108, %v1750
  %1783 = vst.msk [vmem:[#allocation4 + $0x10] sm:$0xff] %vm1108, %v1751
  %1784 = vst.msk [vmem:[#allocation4 + $0x18] sm:$0xff] %vm1108, %v1752
  %1785 = vst.msk [vmem:[#allocation4 + $0x20] sm:$0xff] %vm1108, %v1753
  %1786 = vst.msk [vmem:[#allocation4 + $0x28] sm:$0xff] %vm1108, %v1754
  %1787 = vst.msk [vmem:[#allocation4 + $0x30] sm:$0xff] %vm1108, %v1755
  %1788 = vst.msk [vmem:[#allocation4 + $0x38] sm:$0xff] %vm1108, %v1756
  %1789 = vst.msk [vmem:[#allocation4 + $0x40] sm:$0xff] %vm1108, %v1757
  %1790 = vst.msk [vmem:[#allocation4 + $0x48] sm:$0xff] %vm1108, %v1758
  %1791 = vst.msk [vmem:[#allocation4 + $0x50] sm:$0xff] %vm1108, %v1759
  %1792 = vst.msk [vmem:[#allocation4 + $0x58] sm:$0xff] %vm1108, %v1760
  %1793 = vst.msk [vmem:[#allocation4 + $0x60] sm:$0xff] %vm1108, %v1761
  %1794 = vst.msk [vmem:[#allocation4 + $0x68] sm:$0xff] %vm1108, %v1762
  %1795 = vst.msk [vmem:[#allocation4 + $0x70] sm:$0xff] %vm1108, %v1763
  %1796 = vst.msk [vmem:[#allocation4 + $0x78] sm:$0xff] %vm1108, %v1764
  %1797 = vst.msk [vmem:[#allocation4 + $0x80] sm:$0xff] %vm1108, %v1765
  %1798 = vst.msk [vmem:[#allocation4 + $0x88] sm:$0xff] %vm1108, %v1766
  %1799 = vst.msk [vmem:[#allocation4 + $0x90] sm:$0xff] %vm1108, %v1767
  %1800 = vst.msk [vmem:[#allocation4 + $0x98] sm:$0xff] %vm1108, %v1768
  %1801 = vst.msk [vmem:[#allocation4 + $0xa0] sm:$0xff] %vm1108, %v1769
  %1802 = vst.msk [vmem:[#allocation4 + $0xa8] sm:$0xff] %vm1108, %v1770
  %1803 = vst.msk [vmem:[#allocation4 + $0xb0] sm:$0xff] %vm1108, %v1771
  %1804 = vst.msk [vmem:[#allocation4 + $0xb8] sm:$0xff] %vm1108, %v1772
  %1805 = vst.msk [vmem:[#allocation4 + $0xc0] sm:$0xff] %vm1108, %v1773
  %1806 = vst.msk [vmem:[#allocation4 + $0xc8] sm:$0xff] %vm1108, %v1774
  %1807 = vst.msk [vmem:[#allocation4 + $0xd0] sm:$0xff] %vm1108, %v1775
  %1808 = vst.msk [vmem:[#allocation4 + $0xd8] sm:$0xff] %vm1108, %v1776
  %1809 = vst.msk [vmem:[#allocation4 + $0xe0] sm:$0xff] %vm1108, %v1777
  %1810 = vst.msk [vmem:[#allocation4 + $0xe8] sm:$0xff] %vm1108, %v1778
  %1811 = vst.msk [vmem:[#allocation4 + $0xf0] sm:$0xff] %vm1108, %v1779
  %1812 = vst.msk [vmem:[#allocation4 + $0xf8] sm:$0xff] %vm1108, %v1780
  %1813 = vst.msk [vmem:[#allocation3] sm:$0xff] %vm1108, %v1237
  %1814 = vst.msk [vmem:[#allocation3 + $0x8] sm:$0xff] %vm1108, %v1238
  %1815 = vst.msk [vmem:[#allocation3 + $0x10] sm:$0xff] %vm1108, %v1239
  %1816 = vst.msk [vmem:[#allocation3 + $0x18] sm:$0xff] %vm1108, %v1240
  %1817 = vst.msk [vmem:[#allocation3 + $0x20] sm:$0xff] %vm1108, %v1241
  %1818 = vst.msk [vmem:[#allocation3 + $0x28] sm:$0xff] %vm1108, %v1242
  %1819 = vst.msk [vmem:[#allocation3 + $0x30] sm:$0xff] %vm1108, %v1243
  %1820 = vst.msk [vmem:[#allocation3 + $0x38] sm:$0xff] %vm1108, %v1244
  %1821 = vst.msk [vmem:[#allocation3 + $0x40] sm:$0xff] %vm1108, %v1245
  %1822 = vst.msk [vmem:[#allocation3 + $0x48] sm:$0xff] %vm1108, %v1246
  %1823 = vst.msk [vmem:[#allocation3 + $0x50] sm:$0xff] %vm1108, %v1247
  %1824 = vst.msk [vmem:[#allocation3 + $0x58] sm:$0xff] %vm1108, %v1248
  %1825 = vst.msk [vmem:[#allocation3 + $0x60] sm:$0xff] %vm1108, %v1249
  %1826 = vst.msk [vmem:[#allocation3 + $0x68] sm:$0xff] %vm1108, %v1250
  %1827 = vst.msk [vmem:[#allocation3 + $0x70] sm:$0xff] %vm1108, %v1251
  %1828 = vst.msk [vmem:[#allocation3 + $0x78] sm:$0xff] %vm1108, %v1252
  %1829 = vst.msk [vmem:[#allocation3 + $0x80] sm:$0xff] %vm1108, %v1253
  %1830 = vst.msk [vmem:[#allocation3 + $0x88] sm:$0xff] %vm1108, %v1254
  %1831 = vst.msk [vmem:[#allocation3 + $0x90] sm:$0xff] %vm1108, %v1255
  %1832 = vst.msk [vmem:[#allocation3 + $0x98] sm:$0xff] %vm1108, %v1256
  %1833 = vst.msk [vmem:[#allocation3 + $0xa0] sm:$0xff] %vm1108, %v1257
  %1834 = vst.msk [vmem:[#allocation3 + $0xa8] sm:$0xff] %vm1108, %v1258
  %1835 = vst.msk [vmem:[#allocation3 + $0xb0] sm:$0xff] %vm1108, %v1259
  %1836 = vst.msk [vmem:[#allocation3 + $0xb8] sm:$0xff] %vm1108, %v1260
  %1837 = vst.msk [vmem:[#allocation3 + $0xc0] sm:$0xff] %vm1108, %v1261
  %1838 = vst.msk [vmem:[#allocation3 + $0xc8] sm:$0xff] %vm1108, %v1262
  %1839 = vst.msk [vmem:[#allocation3 + $0xd0] sm:$0xff] %vm1108, %v1263
  %1840 = vst.msk [vmem:[#allocation3 + $0xd8] sm:$0xff] %vm1108, %v1264
  %1841 = vst.msk [vmem:[#allocation3 + $0xe0] sm:$0xff] %vm1108, %v1265
  %1842 = vst.msk [vmem:[#allocation3 + $0xe8] sm:$0xff] %vm1108, %v1266
  %1843 = vst.msk [vmem:[#allocation3 + $0xf0] sm:$0xff] %vm1108, %v1267
  %1844 = vst.msk [vmem:[#allocation3 + $0xf8] sm:$0xff] %vm1108, %v1268
  // Predicated region
  $region30: #{tpu_custom_call.1} parent=0 // pred_check
    %p1845 = pneg %p24
  $region31: #{tpu_custom_call.1} parent=0 // pred_check_branch
    %1847 = sbr.rel (%p1845) target = $region33
  $region32: #{tpu_custom_call.1} parent=0 // pred_region
    %v1848 = vld [vmem:[#allocation5] sm:$0xff]
    %v1849 = vld [vmem:[#allocation5 + $0x8] sm:$0xff]
    %v1850 = vld [vmem:[#allocation5 + $0x10] sm:$0xff]
    %v1851 = vld [vmem:[#allocation5 + $0x18] sm:$0xff]
    %v1852 = vld [vmem:[#allocation5 + $0x20] sm:$0xff]
    %v1853 = vld [vmem:[#allocation5 + $0x28] sm:$0xff]
    %v1854 = vld [vmem:[#allocation5 + $0x30] sm:$0xff]
    %v1855 = vld [vmem:[#allocation5 + $0x38] sm:$0xff]
    %v1856 = vld [vmem:[#allocation5 + $0x40] sm:$0xff]
    %v1857 = vld [vmem:[#allocation5 + $0x48] sm:$0xff]
    %v1858 = vld [vmem:[#allocation5 + $0x50] sm:$0xff]
    %v1859 = vld [vmem:[#allocation5 + $0x58] sm:$0xff]
    %v1860 = vld [vmem:[#allocation5 + $0x60] sm:$0xff]
    %v1861 = vld [vmem:[#allocation5 + $0x68] sm:$0xff]
    %v1862 = vld [vmem:[#allocation5 + $0x70] sm:$0xff]
    %v1863 = vld [vmem:[#allocation5 + $0x78] sm:$0xff]
    %v1864 = vld [vmem:[#allocation5 + $0x80] sm:$0xff]
    %v1865 = vld [vmem:[#allocation5 + $0x88] sm:$0xff]
    %v1866 = vld [vmem:[#allocation5 + $0x90] sm:$0xff]
    %v1867 = vld [vmem:[#allocation5 + $0x98] sm:$0xff]
    %v1868 = vld [vmem:[#allocation5 + $0xa0] sm:$0xff]
    %v1869 = vld [vmem:[#allocation5 + $0xa8] sm:$0xff]
    %v1870 = vld [vmem:[#allocation5 + $0xb0] sm:$0xff]
    %v1871 = vld [vmem:[#allocation5 + $0xb8] sm:$0xff]
    %v1872 = vld [vmem:[#allocation5 + $0xc0] sm:$0xff]
    %v1873 = vld [vmem:[#allocation5 + $0xc8] sm:$0xff]
    %v1874 = vld [vmem:[#allocation5 + $0xd0] sm:$0xff]
    %v1875 = vld [vmem:[#allocation5 + $0xd8] sm:$0xff]
    %v1876 = vld [vmem:[#allocation5 + $0xe0] sm:$0xff]
    %v1877 = vld [vmem:[#allocation5 + $0xe8] sm:$0xff]
    %v1878 = vld [vmem:[#allocation5 + $0xf0] sm:$0xff]
    %v1879 = vld [vmem:[#allocation5 + $0xf8] sm:$0xff]
    %v1880 = vld [vmem:[#allocation3] sm:$0xff]
    %v1881 = vld [vmem:[#allocation3 + $0x8] sm:$0xff]
    %v1882 = vld [vmem:[#allocation3 + $0x10] sm:$0xff]
    %v1883 = vld [vmem:[#allocation3 + $0x18] sm:$0xff]
    %v1884 = vld [vmem:[#allocation3 + $0x20] sm:$0xff]
    %v1885 = vld [vmem:[#allocation3 + $0x28] sm:$0xff]
    %v1886 = vld [vmem:[#allocation3 + $0x30] sm:$0xff]
    %v1887 = vld [vmem:[#allocation3 + $0x38] sm:$0xff]
    %v1888 = vld [vmem:[#allocation3 + $0x40] sm:$0xff]
    %v1889 = vld [vmem:[#allocation3 + $0x48] sm:$0xff]
    %v1890 = vld [vmem:[#allocation3 + $0x50] sm:$0xff]
    %v1891 = vld [vmem:[#allocation3 + $0x58] sm:$0xff]
    %v1892 = vld [vmem:[#allocation3 + $0x60] sm:$0xff]
    %v1893 = vld [vmem:[#allocation3 + $0x68] sm:$0xff]
    %v1894 = vld [vmem:[#allocation3 + $0x70] sm:$0xff]
    %v1895 = vld [vmem:[#allocation3 + $0x78] sm:$0xff]
    %v1896 = vld [vmem:[#allocation3 + $0x80] sm:$0xff]
    %v1897 = vld [vmem:[#allocation3 + $0x88] sm:$0xff]
    %v1898 = vld [vmem:[#allocation3 + $0x90] sm:$0xff]
    %v1899 = vld [vmem:[#allocation3 + $0x98] sm:$0xff]
    %v1900 = vld [vmem:[#allocation3 + $0xa0] sm:$0xff]
    %v1901 = vld [vmem:[#allocation3 + $0xa8] sm:$0xff]
    %v1902 = vld [vmem:[#allocation3 + $0xb0] sm:$0xff]
    %v1903 = vld [vmem:[#allocation3 + $0xb8] sm:$0xff]
    %v1904 = vld [vmem:[#allocation3 + $0xc0] sm:$0xff]
    %v1905 = vld [vmem:[#allocation3 + $0xc8] sm:$0xff]
    %v1906 = vld [vmem:[#allocation3 + $0xd0] sm:$0xff]
    %v1907 = vld [vmem:[#allocation3 + $0xd8] sm:$0xff]
    %v1908 = vld [vmem:[#allocation3 + $0xe0] sm:$0xff]
    %v1909 = vld [vmem:[#allocation3 + $0xe8] sm:$0xff]
    %v1910 = vld [vmem:[#allocation3 + $0xf0] sm:$0xff]
    %v1911 = vld [vmem:[#allocation3 + $0xf8] sm:$0xff]
    %v1912 = vld [vmem:[#allocation4] sm:$0xff]
    %v1913 = vld [vmem:[#allocation4 + $0x8] sm:$0xff]
    %v1914 = vld [vmem:[#allocation4 + $0x10] sm:$0xff]
    %v1915 = vld [vmem:[#allocation4 + $0x18] sm:$0xff]
    %v1916 = vld [vmem:[#allocation4 + $0x20] sm:$0xff]
    %v1917 = vld [vmem:[#allocation4 + $0x28] sm:$0xff]
    %v1918 = vld [vmem:[#allocation4 + $0x30] sm:$0xff]
    %v1919 = vld [vmem:[#allocation4 + $0x38] sm:$0xff]
    %v1920 = vld [vmem:[#allocation4 + $0x40] sm:$0xff]
    %v1921 = vld [vmem:[#allocation4 + $0x48] sm:$0xff]
    %v1922 = vld [vmem:[#allocation4 + $0x50] sm:$0xff]
    %v1923 = vld [vmem:[#allocation4 + $0x58] sm:$0xff]
    %v1924 = vld [vmem:[#allocation4 + $0x60] sm:$0xff]
    %v1925 = vld [vmem:[#allocation4 + $0x68] sm:$0xff]
    %v1926 = vld [vmem:[#allocation4 + $0x70] sm:$0xff]
    %v1927 = vld [vmem:[#allocation4 + $0x78] sm:$0xff]
    %v1928 = vld [vmem:[#allocation4 + $0x80] sm:$0xff]
    %v1929 = vld [vmem:[#allocation4 + $0x88] sm:$0xff]
    %v1930 = vld [vmem:[#allocation4 + $0x90] sm:$0xff]
    %v1931 = vld [vmem:[#allocation4 + $0x98] sm:$0xff]
    %v1932 = vld [vmem:[#allocation4 + $0xa0] sm:$0xff]
    %v1933 = vld [vmem:[#allocation4 + $0xa8] sm:$0xff]
    %v1934 = vld [vmem:[#allocation4 + $0xb0] sm:$0xff]
    %v1935 = vld [vmem:[#allocation4 + $0xb8] sm:$0xff]
    %v1936 = vld [vmem:[#allocation4 + $0xc0] sm:$0xff]
    %v1937 = vld [vmem:[#allocation4 + $0xc8] sm:$0xff]
    %v1938 = vld [vmem:[#allocation4 + $0xd0] sm:$0xff]
    %v1939 = vld [vmem:[#allocation4 + $0xd8] sm:$0xff]
    %v1940 = vld [vmem:[#allocation4 + $0xe0] sm:$0xff]
    %v1941 = vld [vmem:[#allocation4 + $0xe8] sm:$0xff]
    %v1942 = vld [vmem:[#allocation4 + $0xf0] sm:$0xff]
    %v1943 = vld [vmem:[#allocation4 + $0xf8] sm:$0xff]
    %v1944 = vlog2.pop %v1912
    %v1945 = vmul.f32 %v1944, 0.6931472
    %v1946 = vlog2.pop %v1913
    %v1947 = vmul.f32 %v1946, 0.6931472
    %v1948 = vlog2.pop %v1914
    %v1949 = vmul.f32 %v1948, 0.6931472
    %v1950 = vlog2.pop %v1915
    %v1951 = vmul.f32 %v1950, 0.6931472
    %v1952 = vlog2.pop %v1916
    %v1953 = vmul.f32 %v1952, 0.6931472
    %v1954 = vlog2.pop %v1917
    %v1955 = vmul.f32 %v1954, 0.6931472
    %v1956 = vlog2.pop %v1918
    %v1957 = vmul.f32 %v1956, 0.6931472
    %v1958 = vlog2.pop %v1919
    %v1959 = vmul.f32 %v1958, 0.6931472
    %v1960 = vlog2.pop %v1920
    %v1961 = vmul.f32 %v1960, 0.6931472
    %v1962 = vlog2.pop %v1921
    %v1963 = vmul.f32 %v1962, 0.6931472
    %v1964 = vlog2.pop %v1922
    %v1965 = vmul.f32 %v1964, 0.6931472
    %v1966 = vlog2.pop %v1923
    %v1967 = vmul.f32 %v1966, 0.6931472
    %v1968 = vlog2.pop %v1924
    %v1969 = vmul.f32 %v1968, 0.6931472
    %v1970 = vlog2.pop %v1925
    %v1971 = vmul.f32 %v1970, 0.6931472
    %v1972 = vlog2.pop %v1926
    %v1973 = vmul.f32 %v1972, 0.6931472
    %v1974 = vlog2.pop %v1927
    %v1975 = vmul.f32 %v1974, 0.6931472
    %v1976 = vlog2.pop %v1928
    %v1977 = vmul.f32 %v1976, 0.6931472
    %v1978 = vlog2.pop %v1929
    %v1979 = vmul.f32 %v1978, 0.6931472
    %v1980 = vlog2.pop %v1930
    %v1981 = vmul.f32 %v1980, 0.6931472
    %v1982 = vlog2.pop %v1931
    %v1983 = vmul.f32 %v1982, 0.6931472
    %v1984 = vlog2.pop %v1932
    %v1985 = vmul.f32 %v1984, 0.6931472
    %v1986 = vlog2.pop %v1933
    %v1987 = vmul.f32 %v1986, 0.6931472
    %v1988 = vlog2.pop %v1934
    %v1989 = vmul.f32 %v1988, 0.6931472
    %v1990 = vlog2.pop %v1935
    %v1991 = vmul.f32 %v1990, 0.6931472
    %v1992 = vlog2.pop %v1936
    %v1993 = vmul.f32 %v1992, 0.6931472
    %v1994 = vlog2.pop %v1937
    %v1995 = vmul.f32 %v1994, 0.6931472
    %v1996 = vlog2.pop %v1938
    %v1997 = vmul.f32 %v1996, 0.6931472
    %v1998 = vlog2.pop %v1939
    %v1999 = vmul.f32 %v1998, 0.6931472
    %v2000 = vlog2.pop %v1940
    %v2001 = vmul.f32 %v2000, 0.6931472
    %v2002 = vlog2.pop %v1941
    %v2003 = vmul.f32 %v2002, 0.6931472
    %v2004 = vlog2.pop %v1942
    %v2005 = vmul.f32 %v2004, 0.6931472
    %v2006 = vlog2.pop %v1943
    %v2007 = vmul.f32 %v2006, 0.6931472
    %v2008 = vadd.f32 %v1880, %v1945
    %v2009 = vadd.f32 %v1881, %v1947
    %v2010 = vadd.f32 %v1882, %v1949
    %v2011 = vadd.f32 %v1883, %v1951
    %v2012 = vadd.f32 %v1884, %v1953
    %v2013 = vadd.f32 %v1885, %v1955
    %v2014 = vadd.f32 %v1886, %v1957
    %v2015 = vadd.f32 %v1887, %v1959
    %v2016 = vadd.f32 %v1888, %v1961
    %v2017 = vadd.f32 %v1889, %v1963
    %v2018 = vadd.f32 %v1890, %v1965
    %v2019 = vadd.f32 %v1891, %v1967
    %v2020 = vadd.f32 %v1892, %v1969
    %v2021 = vadd.f32 %v1893, %v1971
    %v2022 = vadd.f32 %v1894, %v1973
    %v2023 = vadd.f32 %v1895, %v1975
    %v2024 = vadd.f32 %v1896, %v1977
    %v2025 = vadd.f32 %v1897, %v1979
    %v2026 = vadd.f32 %v1898, %v1981
    %v2027 = vadd.f32 %v1899, %v1983
    %v2028 = vadd.f32 %v1900, %v1985
    %v2029 = vadd.f32 %v1901, %v1987
    %v2030 = vadd.f32 %v1902, %v1989
    %v2031 = vadd.f32 %v1903, %v1991
    %v2032 = vadd.f32 %v1904, %v1993
    %v2033 = vadd.f32 %v1905, %v1995
    %v2034 = vadd.f32 %v1906, %v1997
    %v2035 = vadd.f32 %v1907, %v1999
    %v2036 = vadd.f32 %v1908, %v2001
    %v2037 = vadd.f32 %v1909, %v2003
    %v2038 = vadd.f32 %v1910, %v2005
    %v2039 = vadd.f32 %v1911, %v2007
    %v2040 = vsub.f32 %v1848, %v2008
    %v2041 = vsub.f32 %v1849, %v2009
    %v2042 = vsub.f32 %v1850, %v2010
    %v2043 = vsub.f32 %v1851, %v2011
    %v2044 = vsub.f32 %v1852, %v2012
    %v2045 = vsub.f32 %v1853, %v2013
    %v2046 = vsub.f32 %v1854, %v2014
    %v2047 = vsub.f32 %v1855, %v2015
    %v2048 = vsub.f32 %v1856, %v2016
    %v2049 = vsub.f32 %v1857, %v2017
    %v2050 = vsub.f32 %v1858, %v2018
    %v2051 = vsub.f32 %v1859, %v2019
    %v2052 = vsub.f32 %v1860, %v2020
    %v2053 = vsub.f32 %v1861, %v2021
    %v2054 = vsub.f32 %v1862, %v2022
    %v2055 = vsub.f32 %v1863, %v2023
    %v2056 = vsub.f32 %v1864, %v2024
    %v2057 = vsub.f32 %v1865, %v2025
    %v2058 = vsub.f32 %v1866, %v2026
    %v2059 = vsub.f32 %v1867, %v2027
    %v2060 = vsub.f32 %v1868, %v2028
    %v2061 = vsub.f32 %v1869, %v2029
    %v2062 = vsub.f32 %v1870, %v2030
    %v2063 = vsub.f32 %v1871, %v2031
    %v2064 = vsub.f32 %v1872, %v2032
    %v2065 = vsub.f32 %v1873, %v2033
    %v2066 = vsub.f32 %v1874, %v2034
    %v2067 = vsub.f32 %v1875, %v2035
    %v2068 = vsub.f32 %v1876, %v2036
    %v2069 = vsub.f32 %v1877, %v2037
    %v2070 = vsub.f32 %v1878, %v2038
    %v2071 = vsub.f32 %v1879, %v2039
    %2072 = vst.msk [vmem:[%s6] sm:$0xff] %vm1108, %v2040
    %2073 = vst.msk [vmem:[%s6 + $0x8] sm:$0xff] %vm1108, %v2041
    %2074 = vst.msk [vmem:[%s6 + $0x10] sm:$0xff] %vm1108, %v2042
    %2075 = vst.msk [vmem:[%s6 + $0x18] sm:$0xff] %vm1108, %v2043
    %2076 = vst.msk [vmem:[%s6 + $0x20] sm:$0xff] %vm1108, %v2044
    %2077 = vst.msk [vmem:[%s6 + $0x28] sm:$0xff] %vm1108, %v2045
    %2078 = vst.msk [vmem:[%s6 + $0x30] sm:$0xff] %vm1108, %v2046
    %2079 = vst.msk [vmem:[%s6 + $0x38] sm:$0xff] %vm1108, %v2047
    %2080 = vst.msk [vmem:[%s6 + $0x40] sm:$0xff] %vm1108, %v2048
    %2081 = vst.msk [vmem:[%s6 + $0x48] sm:$0xff] %vm1108, %v2049
    %2082 = vst.msk [vmem:[%s6 + $0x50] sm:$0xff] %vm1108, %v2050
    %2083 = vst.msk [vmem:[%s6 + $0x58] sm:$0xff] %vm1108, %v2051
    %2084 = vst.msk [vmem:[%s6 + $0x60] sm:$0xff] %vm1108, %v2052
    %2085 = vst.msk [vmem:[%s6 + $0x68] sm:$0xff] %vm1108, %v2053
    %2086 = vst.msk [vmem:[%s6 + $0x70] sm:$0xff] %vm1108, %v2054
    %2087 = vst.msk [vmem:[%s6 + $0x78] sm:$0xff] %vm1108, %v2055
    %2088 = vst.msk [vmem:[%s6 + $0x80] sm:$0xff] %vm1108, %v2056
    %2089 = vst.msk [vmem:[%s6 + $0x88] sm:$0xff] %vm1108, %v2057
    %2090 = vst.msk [vmem:[%s6 + $0x90] sm:$0xff] %vm1108, %v2058
    %2091 = vst.msk [vmem:[%s6 + $0x98] sm:$0xff] %vm1108, %v2059
    %2092 = vst.msk [vmem:[%s6 + $0xa0] sm:$0xff] %vm1108, %v2060
    %2093 = vst.msk [vmem:[%s6 + $0xa8] sm:$0xff] %vm1108, %v2061
    %2094 = vst.msk [vmem:[%s6 + $0xb0] sm:$0xff] %vm1108, %v2062
    %2095 = vst.msk [vmem:[%s6 + $0xb8] sm:$0xff] %vm1108, %v2063
    %2096 = vst.msk [vmem:[%s6 + $0xc0] sm:$0xff] %vm1108, %v2064
    %2097 = vst.msk [vmem:[%s6 + $0xc8] sm:$0xff] %vm1108, %v2065
    %2098 = vst.msk [vmem:[%s6 + $0xd0] sm:$0xff] %vm1108, %v2066
    %2099 = vst.msk [vmem:[%s6 + $0xd8] sm:$0xff] %vm1108, %v2067
    %2100 = vst.msk [vmem:[%s6 + $0xe0] sm:$0xff] %vm1108, %v2068
    %2101 = vst.msk [vmem:[%s6 + $0xe8] sm:$0xff] %vm1108, %v2069
    %2102 = vst.msk [vmem:[%s6 + $0xf0] sm:$0xff] %vm1108, %v2070
    %2103 = vst.msk [vmem:[%s6 + $0xf8] sm:$0xff] %vm1108, %v2071
  $region33: #{tpu_custom_call.1} parent=0 // pred_fallthru
    _
  // Predicated region
  $region34: #{tpu_custom_call.1} parent=0 // pred_check
    _
  $region35: #{tpu_custom_call.1} parent=0 // pred_check_branch
    %2105 = sbr.rel (0) target = $region37
  $region36: #{tpu_custom_call.1} parent=0 // pred_region
    _
  $region37: #{tpu_custom_call.1} parent=0 // pred_fallthru
    _
  // Predicated region
  $region38: #{tpu_custom_call.1} parent=0 // pred_check
    _
  $region39: #{tpu_custom_call.1} parent=0 // pred_check_branch
    %2107 = sbr.rel (0) target = $region41
  $region40: #{tpu_custom_call.1} parent=0 // pred_region
    _
  $region41: #{tpu_custom_call.1} parent=0 // pred_fallthru
    _

</llo_original>
